<compile_context>
chip_gen: v6e
topology: v6e:2x2x1
jax: 0.10.0
libtpu: 0.0.40
codegen_flags: <defaults>
</compile_context>

<pallas_src>
import jax
import jax.numpy as jnp
from jax.experimental import pallas as pl
from jax.experimental.pallas import tpu as pltpu

_NUM_CLASSES = 10
_PAD_K = 896          # 784 -> 7*128: lane-aligned fc1 contraction dim
_PAD_N = 128          # lane-dense width for fc4/fc5 outputs and the kernel output
_NEG_BIG = -1e30      # finite "-inf" for masking padded logit columns


def _round_up(n, m):
    return ((n + m - 1) // m) * m


def _mlp_kernel(x_ref,
                w1_ref, b1_ref,
                w2_ref, b2_ref,
                w3_ref, b3_ref,
                w4_ref, b4_ref,
                w5_ref, b5_ref,
                o_ref):
    """One batch tile of the full forward pass. Weights are VMEM-resident bf16
    (constant index_maps), matmul inputs bf16, accumulation / bias / elementwise /
    log_softmax math f32 (v5e has no bf16 VPU/EUP)."""
    # TODO(synk): nn.Dropout(p=0.2) in training mode would need pltpu.prng_* masking;
    #             forward semantics here follow eval/inference (identity).
    def layer(h, w_ref, b_ref):
        y = jnp.dot(h.astype(w_ref.dtype), w_ref[...],
                    preferred_element_type=jnp.float32) + b_ref[...]
        return jnp.maximum(y, 0.0)

    h = x_ref[...]                        # bf16 (TB, 896)
    h = layer(h, w1_ref, b1_ref)
    h = layer(h, w2_ref, b2_ref)
    h = layer(h, w3_ref, b3_ref)
    h = layer(h, w4_ref, b4_ref)          # padded cols stay 0 after ReLU

    logits = jnp.dot(h.astype(w5_ref.dtype), w5_ref[...],
                     preferred_element_type=jnp.float32) + b5_ref[...]
    # Mask padded logit columns so log_softmax normalizes over the real 10 classes.
    col = jax.lax.broadcasted_iota(jnp.int32, logits.shape, 1)
    logits = jnp.where(col < _NUM_CLASSES, logits, _NEG_BIG)

    m = jnp.max(logits, axis=-1, keepdims=True)
    shifted = logits - m
    lse = jnp.log(jnp.sum(jnp.exp(shifted), axis=-1, keepdims=True))
    o_ref[...] = (shifted - lse).astype(o_ref.dtype)


def prepare_params(params):
    """Cast weights to bf16; pad fc1 K to 896 and fc4/fc5 to 128-wide (lane-dense).
    Biases stay f32; padded columns are zero and masked in-kernel for fc5."""
    (w1, b1), (w2, b2), (w3, b3), (w4, b4), (w5, b5) = params
    w1p = jnp.pad(w1, ((0, _PAD_K - w1.shape[0]), (0, 0)))
    w4p = jnp.pad(w4, ((0, 0), (0, _PAD_N - w4.shape[1])))
    b4p = jnp.pad(b4, ((0, 0), (0, _PAD_N - b4.shape[1])))
    w5p = jnp.pad(w5, ((0, _PAD_N - w5.shape[0]), (0, _PAD_N - w5.shape[1])))
    b5p = jnp.pad(b5, ((0, 0), (0, _PAD_N - b5.shape[1])))
    bf = lambda w: w.astype(jnp.bfloat16)
    return ((bf(w1p), b1), (bf(w2), b2), (bf(w3), b3), (bf(w4p), b4p), (bf(w5p), b5p))


def classifier2_forward(x, prepared_params, *, tb=1024):
    """x: (B, 1, 28, 28) or (B, 784). Returns (B, 10) f32 log-probabilities."""
    B = x.shape[0]
    x_flat = x.reshape(B, -1)
    assert x_flat.shape[1] == 784

    # Batch tile: up to 1024 rows, 16-row aligned (bf16 sublane packing); small
    # batches get one padded tile.  Keep >= 2 grid steps when B >= 32 so the
    # "parallel" batch axis spans both TensorCores on v7x.
    TB = min(tb, _round_up(B, 16))
    if B >= 32:
        TB = min(TB, _round_up((B + 1) // 2, 16))
    B_pad = _round_up(B, TB)
    grid = (B_pad // TB,)

    # bf16 cast + K/batch zero-pad; under jit this fuses with the op feeding the
    # kernel (no standalone HBM round trip for the cast).
    x_flat = jnp.pad(x_flat.astype(jnp.bfloat16),
                     ((0, B_pad - B), (0, _PAD_K - 784)))

    (w1, b1), (w2, b2), (w3, b3), (w4, b4), (w5, b5) = prepared_params
    weights = (w1, b1, w2, b2, w3, b3, w4, b4, w5, b5)

    # x / out tiled over the batch grid; weights full-shape with constant
    # index_maps (stay resident in VMEM across grid steps).
    resident = lambda a: pl.BlockSpec(a.shape, lambda i: (0, 0))
    in_specs = [pl.BlockSpec((TB, _PAD_K), lambda i: (i, 0))] + [resident(a) for a in weights]
    out_specs = pl.BlockSpec((TB, _PAD_N), lambda i: (i, 0))

    out = pl.pallas_call(
        _mlp_kernel,
        out_shape=jax.ShapeDtypeStruct((B_pad, _PAD_N), jnp.float32),
        grid=grid,
        in_specs=in_specs,
        out_specs=out_specs,
        compiler_params=pltpu.CompilerParams(
            dimension_semantics=("parallel",),
            vmem_limit_bytes=(32 << 20) if TB >= 512 else (16 << 20),
        ),
    )(x_flat, *weights)

    return out[:B, :_NUM_CLASSES]


def init_params(key):
    """Deterministic init; weights stored as (in, out) so the kernel does x @ W."""
    dims = [784, 512, 256, 128, 64, 10]
    params = []
    for i in range(5):
        key, kw, kb = jax.random.split(key, 3)
        fan_in, fan_out = dims[i], dims[i + 1]
        bound = 1.0 / jnp.sqrt(fan_in)
        w = jax.random.uniform(kw, (fan_in, fan_out), jnp.float32, -bound, bound)
        b = jax.random.uniform(kb, (1, fan_out), jnp.float32, -bound, bound)
        params.append((w, b))
    return params


def _reference(x, prepared_params):
    """Pure-JAX reference on the same prepared (bf16, padded) params / cast path."""
    h = x.reshape(x.shape[0], -1)
    h = jnp.pad(h.astype(jnp.bfloat16), ((0, 0), (0, _PAD_K - h.shape[1])))
    for i, (w, b) in enumerate(prepared_params):
        h = jnp.dot(h.astype(w.dtype), w, preferred_element_type=jnp.float32) + b
        if i < 4:
            h = jnp.maximum(h, 0.0)
    logits = h[:, :_NUM_CLASSES]
    return jax.nn.log_softmax(logits, axis=1)


if __name__ == "__main__":
    key = jax.random.PRNGKey(0)
    kp, kx = jax.random.split(key)
    params = prepare_params(init_params(kp))

    B = 8
    x = jax.random.normal(kx, (B, 1, 28, 28), jnp.float32)  # NCHW, flattened inside

    fwd = jax.jit(classifier2_forward)
    out = jax.block_until_ready(fwd(x, params))
    ref = _reference(x, params)

    assert out.shape == (B, _NUM_CLASSES)
    assert jnp.allclose(out, ref, atol=1e-3, rtol=1e-3)
    print("KERNEL_OK")
</pallas_src>

<mosaic_0001>
module attributes {stable_mosaic.version = 11 : i64} {
  func.func @_mlp_kernel(%arg0: i32, %arg1: memref<16x896xbf16, #tpu.memory_space<vmem>>, %arg2: memref<896x512xbf16, #tpu.memory_space<vmem>>, %arg3: memref<1x512xf32, #tpu.memory_space<vmem>>, %arg4: memref<512x256xbf16, #tpu.memory_space<vmem>>, %arg5: memref<1x256xf32, #tpu.memory_space<vmem>>, %arg6: memref<256x128xbf16, #tpu.memory_space<vmem>>, %arg7: memref<1x128xf32, #tpu.memory_space<vmem>>, %arg8: memref<128x128xbf16, #tpu.memory_space<vmem>>, %arg9: memref<1x128xf32, #tpu.memory_space<vmem>>, %arg10: memref<128x128xbf16, #tpu.memory_space<vmem>>, %arg11: memref<1x128xf32, #tpu.memory_space<vmem>>, %arg12: memref<16x128xf32, #tpu.memory_space<vmem>>) attributes {dimension_semantics = [#tpu.dimension_semantics<parallel>], iteration_bounds = array<i64: 1>, scalar_prefetch = 0 : i64, scratch_operands = 0 : i64, tpu.core_type = #tpu.core_type<tc>, window_params = [{transform_indices = @transform_0, window_bounds = array<i64: 16, 896>}, {pipeline_mode = #tpu.pipeline_mode<synchronous>, transform_indices = @transform_1, window_bounds = array<i64: 896, 512>}, {pipeline_mode = #tpu.pipeline_mode<synchronous>, transform_indices = @transform_2, window_bounds = array<i64: 1, 512>}, {pipeline_mode = #tpu.pipeline_mode<synchronous>, transform_indices = @transform_3, window_bounds = array<i64: 512, 256>}, {pipeline_mode = #tpu.pipeline_mode<synchronous>, transform_indices = @transform_4, window_bounds = array<i64: 1, 256>}, {pipeline_mode = #tpu.pipeline_mode<synchronous>, transform_indices = @transform_5, window_bounds = array<i64: 256, 128>}, {pipeline_mode = #tpu.pipeline_mode<synchronous>, transform_indices = @transform_6, window_bounds = array<i64: 1, 128>}, {pipeline_mode = #tpu.pipeline_mode<synchronous>, transform_indices = @transform_7, window_bounds = array<i64: 128, 128>}, {pipeline_mode = #tpu.pipeline_mode<synchronous>, transform_indices = @transform_8, window_bounds = array<i64: 1, 128>}, {pipeline_mode = #tpu.pipeline_mode<synchronous>, transform_indices = @transform_9, window_bounds = array<i64: 128, 128>}, {pipeline_mode = #tpu.pipeline_mode<synchronous>, transform_indices = @transform_10, window_bounds = array<i64: 1, 128>}, {transform_indices = @transform_11, window_bounds = array<i64: 16, 128>}]} {
    %c0 = arith.constant 0 : index
    %c0_0 = arith.constant 0 : index
    %0 = vector.load %arg1[%c0, %c0_0] : memref<16x896xbf16, #tpu.memory_space<vmem>>, vector<16x896xbf16>
    %c0_1 = arith.constant 0 : index
    %c0_2 = arith.constant 0 : index
    %1 = vector.load %arg2[%c0_1, %c0_2] : memref<896x512xbf16, #tpu.memory_space<vmem>>, vector<896x512xbf16>
    %cst = arith.constant dense<0.000000e+00> : vector<16x512xf32>
    %2 = tpu.matmul %0, %1, %cst {dimension_numbers = #tpu.dot_dimension_numbers<[1], [0], [0], [1], [0, 0, 1, 1], [], []>} : vector<16x896xbf16>, vector<896x512xbf16>, vector<16x512xf32> -> vector<16x512xf32>
    %c0_3 = arith.constant 0 : index
    %c0_4 = arith.constant 0 : index
    %3 = vector.load %arg3[%c0_3, %c0_4] : memref<1x512xf32, #tpu.memory_space<vmem>>, vector<1x512xf32>
    %4 = vector.broadcast %3 : vector<1x512xf32> to vector<16x512xf32>
    %5 = arith.addf %2, %4 : vector<16x512xf32>
    %cst_5 = arith.constant 0.000000e+00 : f32
    %6 = vector.broadcast %cst_5 : f32 to vector<16x512xf32>
    %7 = arith.maximumf %5, %6 : vector<16x512xf32>
    %8 = arith.truncf %7 : vector<16x512xf32> to vector<16x512xbf16>
    %c0_6 = arith.constant 0 : index
    %c0_7 = arith.constant 0 : index
    %9 = vector.load %arg4[%c0_6, %c0_7] : memref<512x256xbf16, #tpu.memory_space<vmem>>, vector<512x256xbf16>
    %cst_8 = arith.constant dense<0.000000e+00> : vector<16x256xf32>
    %10 = tpu.matmul %8, %9, %cst_8 {dimension_numbers = #tpu.dot_dimension_numbers<[1], [0], [0], [1], [0, 0, 1, 1], [], []>} : vector<16x512xbf16>, vector<512x256xbf16>, vector<16x256xf32> -> vector<16x256xf32>
    %c0_9 = arith.constant 0 : index
    %c0_10 = arith.constant 0 : index
    %11 = vector.load %arg5[%c0_9, %c0_10] : memref<1x256xf32, #tpu.memory_space<vmem>>, vector<1x256xf32>
    %12 = vector.broadcast %11 : vector<1x256xf32> to vector<16x256xf32>
    %13 = arith.addf %10, %12 : vector<16x256xf32>
    %cst_11 = arith.constant 0.000000e+00 : f32
    %14 = vector.broadcast %cst_11 : f32 to vector<16x256xf32>
    %15 = arith.maximumf %13, %14 : vector<16x256xf32>
    %16 = arith.truncf %15 : vector<16x256xf32> to vector<16x256xbf16>
    %c0_12 = arith.constant 0 : index
    %c0_13 = arith.constant 0 : index
    %17 = vector.load %arg6[%c0_12, %c0_13] : memref<256x128xbf16, #tpu.memory_space<vmem>>, vector<256x128xbf16>
    %cst_14 = arith.constant dense<0.000000e+00> : vector<16x128xf32>
    %18 = tpu.matmul %16, %17, %cst_14 {dimension_numbers = #tpu.dot_dimension_numbers<[1], [0], [0], [1], [0, 0, 1, 1], [], []>} : vector<16x256xbf16>, vector<256x128xbf16>, vector<16x128xf32> -> vector<16x128xf32>
    %c0_15 = arith.constant 0 : index
    %c0_16 = arith.constant 0 : index
    %19 = vector.load %arg7[%c0_15, %c0_16] : memref<1x128xf32, #tpu.memory_space<vmem>>, vector<1x128xf32>
    %20 = vector.broadcast %19 : vector<1x128xf32> to vector<16x128xf32>
    %21 = arith.addf %18, %20 : vector<16x128xf32>
    %cst_17 = arith.constant 0.000000e+00 : f32
    %22 = vector.broadcast %cst_17 : f32 to vector<16x128xf32>
    %23 = arith.maximumf %21, %22 : vector<16x128xf32>
    %24 = arith.truncf %23 : vector<16x128xf32> to vector<16x128xbf16>
    %c0_18 = arith.constant 0 : index
    %c0_19 = arith.constant 0 : index
    %25 = vector.load %arg8[%c0_18, %c0_19] : memref<128x128xbf16, #tpu.memory_space<vmem>>, vector<128x128xbf16>
    %cst_20 = arith.constant dense<0.000000e+00> : vector<16x128xf32>
    %26 = tpu.matmul %24, %25, %cst_20 {dimension_numbers = #tpu.dot_dimension_numbers<[1], [0], [0], [1], [0, 0, 1, 1], [], []>} : vector<16x128xbf16>, vector<128x128xbf16>, vector<16x128xf32> -> vector<16x128xf32>
    %c0_21 = arith.constant 0 : index
    %c0_22 = arith.constant 0 : index
    %27 = vector.load %arg9[%c0_21, %c0_22] : memref<1x128xf32, #tpu.memory_space<vmem>>, vector<1x128xf32>
    %28 = vector.broadcast %27 : vector<1x128xf32> to vector<16x128xf32>
    %29 = arith.addf %26, %28 : vector<16x128xf32>
    %cst_23 = arith.constant 0.000000e+00 : f32
    %30 = vector.broadcast %cst_23 : f32 to vector<16x128xf32>
    %31 = arith.maximumf %29, %30 : vector<16x128xf32>
    %32 = arith.truncf %31 : vector<16x128xf32> to vector<16x128xbf16>
    %c0_24 = arith.constant 0 : index
    %c0_25 = arith.constant 0 : index
    %33 = vector.load %arg10[%c0_24, %c0_25] : memref<128x128xbf16, #tpu.memory_space<vmem>>, vector<128x128xbf16>
    %cst_26 = arith.constant dense<0.000000e+00> : vector<16x128xf32>
    %34 = tpu.matmul %32, %33, %cst_26 {dimension_numbers = #tpu.dot_dimension_numbers<[1], [0], [0], [1], [0, 0, 1, 1], [], []>} : vector<16x128xbf16>, vector<128x128xbf16>, vector<16x128xf32> -> vector<16x128xf32>
    %c0_27 = arith.constant 0 : index
    %c0_28 = arith.constant 0 : index
    %35 = vector.load %arg11[%c0_27, %c0_28] : memref<1x128xf32, #tpu.memory_space<vmem>>, vector<1x128xf32>
    %36 = vector.broadcast %35 : vector<1x128xf32> to vector<16x128xf32>
    %37 = arith.addf %34, %36 : vector<16x128xf32>
    %38 = tpu.iota {dimensions = array<i32: 1>} : vector<16x128xi32>
    %c10_i32 = arith.constant 10 : i32
    %39 = vector.broadcast %c10_i32 : i32 to vector<16x128xi32>
    %40 = arith.cmpi slt, %38, %39 : vector<16x128xi32>
    %cst_29 = arith.constant -1.000000e+30 : f32
    %41 = vector.broadcast %cst_29 : f32 to vector<16x128xf32>
    %42 = arith.select %40, %37, %41 : vector<16x128xi1>, vector<16x128xf32>
    %cst_30 = arith.constant dense<0xFF800000> : vector<16xf32>
    %43 = vector.multi_reduction <maximumf>, %42, %cst_30 [1] : vector<16x128xf32> to vector<16xf32>
    %44 = vector.shape_cast %43 : vector<16xf32> to vector<16x1xf32>
    %45 = vector.broadcast %44 : vector<16x1xf32> to vector<16x128xf32>
    %46 = arith.subf %42, %45 : vector<16x128xf32>
    %47 = math.exp %46 : vector<16x128xf32>
    %cst_31 = arith.constant dense<0.000000e+00> : vector<16xf32>
    %48 = vector.multi_reduction <add>, %47, %cst_31 [1] : vector<16x128xf32> to vector<16xf32>
    %49 = vector.shape_cast %48 : vector<16xf32> to vector<16x1xf32>
    %50 = math.log %49 : vector<16x1xf32>
    %51 = vector.broadcast %50 : vector<16x1xf32> to vector<16x128xf32>
    %52 = arith.subf %46, %51 : vector<16x128xf32>
    %c0_32 = arith.constant 0 : index
    %c0_33 = arith.constant 0 : index
    %53 = vector.load %arg12[%c0_32, %c0_33] : memref<16x128xf32, #tpu.memory_space<vmem>>, vector<16x128xf32>
    tpu.vector_store %arg12[%c0_32, %c0_33], %52 {strides = array<i32>} : memref<16x128xf32, #tpu.memory_space<vmem>>, vector<16x128xf32>,
    return
  }
  func.func @transform_0(%arg0: i32) -> (i32, i32) {
    %c0_i32 = arith.constant 0 : i32
    %c0_i32_0 = arith.constant 0 : i32
    return %arg0, %c0_i32 : i32, i32
  }
  func.func @transform_1(%arg0: i32) -> (i32, i32) {
    %c0_i32 = arith.constant 0 : i32
    %c0_i32_0 = arith.constant 0 : i32
    %c0_i32_1 = arith.constant 0 : i32
    return %c0_i32, %c0_i32_0 : i32, i32
  }
  func.func @transform_2(%arg0: i32) -> (i32, i32) {
    %c0_i32 = arith.constant 0 : i32
    %c0_i32_0 = arith.constant 0 : i32
    %c0_i32_1 = arith.constant 0 : i32
    return %c0_i32, %c0_i32_0 : i32, i32
  }
  func.func @transform_3(%arg0: i32) -> (i32, i32) {
    %c0_i32 = arith.constant 0 : i32
    %c0_i32_0 = arith.constant 0 : i32
    %c0_i32_1 = arith.constant 0 : i32
    return %c0_i32, %c0_i32_0 : i32, i32
  }
  func.func @transform_4(%arg0: i32) -> (i32, i32) {
    %c0_i32 = arith.constant 0 : i32
    %c0_i32_0 = arith.constant 0 : i32
    %c0_i32_1 = arith.constant 0 : i32
    return %c0_i32, %c0_i32_0 : i32, i32
  }
  func.func @transform_5(%arg0: i32) -> (i32, i32) {
    %c0_i32 = arith.constant 0 : i32
    %c0_i32_0 = arith.constant 0 : i32
    %c0_i32_1 = arith.constant 0 : i32
    return %c0_i32, %c0_i32_0 : i32, i32
  }
  func.func @transform_6(%arg0: i32) -> (i32, i32) {
    %c0_i32 = arith.constant 0 : i32
    %c0_i32_0 = arith.constant 0 : i32
    %c0_i32_1 = arith.constant 0 : i32
    return %c0_i32, %c0_i32_0 : i32, i32
  }
  func.func @transform_7(%arg0: i32) -> (i32, i32) {
    %c0_i32 = arith.constant 0 : i32
    %c0_i32_0 = arith.constant 0 : i32
    %c0_i32_1 = arith.constant 0 : i32
    return %c0_i32, %c0_i32_0 : i32, i32
  }
  func.func @transform_8(%arg0: i32) -> (i32, i32) {
    %c0_i32 = arith.constant 0 : i32
    %c0_i32_0 = arith.constant 0 : i32
    %c0_i32_1 = arith.constant 0 : i32
    return %c0_i32, %c0_i32_0 : i32, i32
  }
  func.func @transform_9(%arg0: i32) -> (i32, i32) {
    %c0_i32 = arith.constant 0 : i32
    %c0_i32_0 = arith.constant 0 : i32
    %c0_i32_1 = arith.constant 0 : i32
    return %c0_i32, %c0_i32_0 : i32, i32
  }
  func.func @transform_10(%arg0: i32) -> (i32, i32) {
    %c0_i32 = arith.constant 0 : i32
    %c0_i32_0 = arith.constant 0 : i32
    %c0_i32_1 = arith.constant 0 : i32
    return %c0_i32, %c0_i32_0 : i32, i32
  }
  func.func @transform_11(%arg0: i32) -> (i32, i32) {
    %c0_i32 = arith.constant 0 : i32
    %c0_i32_0 = arith.constant 0 : i32
    return %arg0, %c0_i32 : i32, i32
  }
}

</mosaic_0001>

<llo_original>
// kernel: classifier2_forward.1
$region0: #{classifier2_forward.1}
  #allocation0 [shape = 'u32[]', space=smem, size = 0x4, offset = 0x4, fixed_abs, tag = 'smem constant byte address 0x4 - core index']
  #allocation1 [shape = 'u32[144,128]{1,0:T(1,128)}', space=vmem, size = 0x12000, scoped, tag = 'internal scratch']
  %s0 = inlined_call_operand.vmem [shape: bf16[16,896], index: 0, kind: input, shape index: {}]
  %s1 = inlined_call_operand.hbm [shape: bf16[896,512], index: 1, kind: input, shape index: {}]
  %s2 = inlined_call_operand.vmem [shape: f32[1,512], index: 2, kind: input, shape index: {}]
  %s3 = inlined_call_operand.vmem [shape: bf16[512,256], index: 3, kind: input, shape index: {}]
  %s4 = inlined_call_operand.vmem [shape: f32[1,256], index: 4, kind: input, shape index: {}]
  %s5 = inlined_call_operand.hbm [shape: bf16[256,128], index: 5, kind: input, shape index: {}]
  %s6 = inlined_call_operand.vmem [shape: f32[1,128], index: 6, kind: input, shape index: {}]
  %s7 = inlined_call_operand.vmem [shape: bf16[128,128], index: 7, kind: input, shape index: {}]
  %s8 = inlined_call_operand.vmem [shape: f32[1,128], index: 8, kind: input, shape index: {}]
  %s9 = inlined_call_operand.hbm [shape: bf16[128,128], index: 9, kind: input, shape index: {}]
  %s10 = inlined_call_operand.vmem [shape: f32[1,128], index: 10, kind: input, shape index: {}]
  %s11 = inlined_call_operand.vmem [shape: f32[16,128], index: 11, kind: output, shape index: {}]
  %s12 = sld [smem:[#allocation0]]
  $region66: #{classifier2_forward.1} parent=0
    _
  %s14 = ssub.s32 1, %s12
  %s15 = scalar_select 0, %s14, %s12
  $region1: #{classifier2_forward.1} parent=0
    #allocation2 [shape = 'u8[917504]{0}', space=vmem, size = 0xe0000, scoped, tag = 'input window, operand 1, single buffered']
    #allocation3 [shape = 's32[1]{0}', space=sflag, size = 0x4, scoped, tag = 'scoped memory for classifier2_forward.1']
    #allocation4 [shape = 'u8[65536]{0}', space=vmem, size = 0x10000, scoped, tag = 'input window, operand 5, single buffered']
    #allocation5 [shape = 's32[1]{0}', space=sflag, size = 0x4, scoped, tag = 'scoped memory for classifier2_forward.1']
    #allocation6 [shape = 'u8[32768]{0}', space=vmem, size = 0x8000, scoped, tag = 'input window, operand 9, single buffered']
    %16 = vsyncpa [#allocation3], 0
    %17 = vsyncpa [#allocation5], 0
    // Predicated region
    $region2: #{classifier2_forward.1} parent=1 // pred_check
      _
    $region3: #{classifier2_forward.1} parent=1 // pred_check_branch
      %19 = sbr.rel (0) target = $region5
    $region4: #{classifier2_forward.1} parent=1 // pred_region
      _
    $region5: #{classifier2_forward.1} parent=1 // pred_fallthru
      _
    // Predicated region
    $region6: #{classifier2_forward.1} parent=1 // pred_check
      _
    $region7: #{classifier2_forward.1} parent=1 // pred_check_branch
      %21 = sbr.rel (0) target = $region9
    $region8: #{classifier2_forward.1} parent=1 // pred_region
      %s23 = ssub.s32 28672, 28672
      %24 = vsyncadd [#allocation3], %s23
      %s25 = sshll.u32 [#allocation2], 4
      %s26 = int_to_ptr.vmem [resolvable:$true] %s25
      %31 = dma.hbm_to_vmem [thread:$0]  %s1, 28672, %s26, [#allocation3], 256, 256, 16
    $region9: #{classifier2_forward.1} parent=1 // pred_fallthru
      _
    // Predicated region
    $region10: #{classifier2_forward.1} parent=1 // pred_check
      _
    $region11: #{classifier2_forward.1} parent=1 // pred_check_branch
      %33 = sbr.rel (0) target = $region13
    $region12: #{classifier2_forward.1} parent=1 // pred_region
      _
    $region13: #{classifier2_forward.1} parent=1 // pred_fallthru
      _
    // Predicated region
    $region14: #{classifier2_forward.1} parent=1 // pred_check
      _
    $region15: #{classifier2_forward.1} parent=1 // pred_check_branch
      %35 = sbr.rel (0) target = $region17
    $region16: #{classifier2_forward.1} parent=1 // pred_region
      _
    $region17: #{classifier2_forward.1} parent=1 // pred_fallthru
      _
    // Predicated region
    $region18: #{classifier2_forward.1} parent=1 // pred_check
      _
    $region19: #{classifier2_forward.1} parent=1 // pred_check_branch
      %37 = sbr.rel (0) target = $region21
    $region20: #{classifier2_forward.1} parent=1 // pred_region
      _
    $region21: #{classifier2_forward.1} parent=1 // pred_fallthru
      _
    // Predicated region
    $region22: #{classifier2_forward.1} parent=1 // pred_check
      _
    $region23: #{classifier2_forward.1} parent=1 // pred_check_branch
      %39 = sbr.rel (0) target = $region25
    $region24: #{classifier2_forward.1} parent=1 // pred_region
      %s41 = ssub.s32 2048, 2048
      %42 = vsyncadd [#allocation5], %s41
      %s43 = sshll.u32 [#allocation4], 4
      %s44 = int_to_ptr.vmem [resolvable:$true] %s43
      %49 = dma.hbm_to_vmem [thread:$0]  %s5, 2048, %s44, [#allocation5], 64, 64, 4
    $region25: #{classifier2_forward.1} parent=1 // pred_fallthru
      _
    // Predicated region
    $region26: #{classifier2_forward.1} parent=1 // pred_check
      _
    $region27: #{classifier2_forward.1} parent=1 // pred_check_branch
      %51 = sbr.rel (0) target = $region29
    $region28: #{classifier2_forward.1} parent=1 // pred_region
      _
    $region29: #{classifier2_forward.1} parent=1 // pred_fallthru
      _
    // Predicated region
    $region30: #{classifier2_forward.1} parent=1 // pred_check
      _
    $region31: #{classifier2_forward.1} parent=1 // pred_check_branch
      %53 = sbr.rel (0) target = $region33
    $region32: #{classifier2_forward.1} parent=1 // pred_region
      _
    $region33: #{classifier2_forward.1} parent=1 // pred_fallthru
      _
    // Predicated region
    $region34: #{classifier2_forward.1} parent=1 // pred_check
      _
    $region35: #{classifier2_forward.1} parent=1 // pred_check_branch
      %55 = sbr.rel (0) target = $region37
    $region36: #{classifier2_forward.1} parent=1 // pred_region
      _
    $region37: #{classifier2_forward.1} parent=1 // pred_fallthru
      _
    // Predicated region
    $region38: #{classifier2_forward.1} parent=1 // pred_check
      _
    $region39: #{classifier2_forward.1} parent=1 // pred_check_branch
      %57 = sbr.rel (0) target = $region41
    $region40: #{classifier2_forward.1} parent=1 // pred_region
      %s59 = ssub.s32 1024, 1024
      %60 = vsyncadd [#allocation5], %s59
      %s61 = sshll.u32 [#allocation6], 4
      %s62 = int_to_ptr.vmem [resolvable:$true] %s61
      %67 = dma.hbm_to_vmem [thread:$0]  %s9, 1024, %s62, [#allocation5], 64, 64, 4
    $region41: #{classifier2_forward.1} parent=1 // pred_fallthru
      _
    // Predicated region
    $region42: #{classifier2_forward.1} parent=1 // pred_check
      _
    $region43: #{classifier2_forward.1} parent=1 // pred_check_branch
      %69 = sbr.rel (0) target = $region45
    $region44: #{classifier2_forward.1} parent=1 // pred_region
      _
    $region45: #{classifier2_forward.1} parent=1 // pred_fallthru
      _
    // Predicated region
    $region46: #{classifier2_forward.1} parent=1 // pred_check
      _
    $region47: #{classifier2_forward.1} parent=1 // pred_check_branch
      %71 = sbr.rel (0) target = $region49
    $region48: #{classifier2_forward.1} parent=1 // pred_region
      %72 = dma.done [#allocation3], 28672
    $region49: #{classifier2_forward.1} parent=1 // pred_fallthru
      _
    // Predicated region
    $region50: #{classifier2_forward.1} parent=1 // pred_check
      _
    $region51: #{classifier2_forward.1} parent=1 // pred_check_branch
      %74 = sbr.rel (0) target = $region53
    $region52: #{classifier2_forward.1} parent=1 // pred_region
      %75 = dma.done [#allocation5], 2048
    $region53: #{classifier2_forward.1} parent=1 // pred_fallthru
      _
    // Predicated region
    $region54: #{classifier2_forward.1} parent=1 // pred_check
      _
    $region55: #{classifier2_forward.1} parent=1 // pred_check_branch
      %77 = sbr.rel (0) target = $region57
    $region56: #{classifier2_forward.1} parent=1 // pred_region
      %78 = dma.done [#allocation5], 1024
    $region57: #{classifier2_forward.1} parent=1 // pred_fallthru
      _
    %v80 = vld [vmem:[%s0] sm:$0xff]
    %v81 = vld [vmem:[%s0 + $0x8] sm:$0xff]
    %v82 = vld [vmem:[%s0 + $0x10] sm:$0xff]
    %v83 = vld [vmem:[%s0 + $0x18] sm:$0xf]
    %v84 = vld [vmem:[%s0 + $0x1c] sm:$0xff]
    %v85 = vld [vmem:[%s0 + $0x24] sm:$0xff]
    %v86 = vld [vmem:[%s0 + $0x2c] sm:$0xff]
    %v87 = vld [vmem:[%s0 + $0x34] sm:$0xf]
    %v88 = vld [vmem:[#allocation2] sm:$0xff]
    %v89 = vld [vmem:[#allocation2 + $0x8] sm:$0xff]
    %v90 = vld [vmem:[#allocation2 + $0x10] sm:$0xff]
    %v91 = vld [vmem:[#allocation2 + $0x18] sm:$0xff]
    %v92 = vld [vmem:[#allocation2 + $0x20] sm:$0xff]
    %v93 = vld [vmem:[#allocation2 + $0x28] sm:$0xff]
    %v94 = vld [vmem:[#allocation2 + $0x30] sm:$0xff]
    %v95 = vld [vmem:[#allocation2 + $0x38] sm:$0xff]
    %v96 = vld [vmem:[#allocation2 + $0x40] sm:$0xff]
    %v97 = vld [vmem:[#allocation2 + $0x48] sm:$0xff]
    %v98 = vld [vmem:[#allocation2 + $0x50] sm:$0xff]
    %v99 = vld [vmem:[#allocation2 + $0x58] sm:$0xff]
    %v100 = vld [vmem:[#allocation2 + $0x60] sm:$0xff]
    %v101 = vld [vmem:[#allocation2 + $0x68] sm:$0xff]
    %v102 = vld [vmem:[#allocation2 + $0x70] sm:$0xff]
    %v103 = vld [vmem:[#allocation2 + $0x78] sm:$0xff]
    %v104 = vld [vmem:[#allocation2 + $0x80] sm:$0xff]
    %v105 = vld [vmem:[#allocation2 + $0x88] sm:$0xff]
    %v106 = vld [vmem:[#allocation2 + $0x90] sm:$0xff]
    %v107 = vld [vmem:[#allocation2 + $0x98] sm:$0xff]
    %v108 = vld [vmem:[#allocation2 + $0xa0] sm:$0xff]
    %v109 = vld [vmem:[#allocation2 + $0xa8] sm:$0xff]
    %v110 = vld [vmem:[#allocation2 + $0xb0] sm:$0xff]
    %v111 = vld [vmem:[#allocation2 + $0xb8] sm:$0xff]
    %v112 = vld [vmem:[#allocation2 + $0xc0] sm:$0xff]
    %v113 = vld [vmem:[#allocation2 + $0xc8] sm:$0xff]
    %v114 = vld [vmem:[#allocation2 + $0xd0] sm:$0xff]
    %v115 = vld [vmem:[#allocation2 + $0xd8] sm:$0xff]
    %v116 = vld [vmem:[#allocation2 + $0xe0] sm:$0xff]
    %v117 = vld [vmem:[#allocation2 + $0xe8] sm:$0xff]
    %v118 = vld [vmem:[#allocation2 + $0xf0] sm:$0xff]
    %v119 = vld [vmem:[#allocation2 + $0xf8] sm:$0xff]
    %v120 = vld [vmem:[#allocation2 + $0x100] sm:$0xff]
    %v121 = vld [vmem:[#allocation2 + $0x108] sm:$0xff]
    %v122 = vld [vmem:[#allocation2 + $0x110] sm:$0xff]
    %v123 = vld [vmem:[#allocation2 + $0x118] sm:$0xff]
    %v124 = vld [vmem:[#allocation2 + $0x120] sm:$0xff]
    %v125 = vld [vmem:[#allocation2 + $0x128] sm:$0xff]
    %v126 = vld [vmem:[#allocation2 + $0x130] sm:$0xff]
    %v127 = vld [vmem:[#allocation2 + $0x138] sm:$0xff]
    %v128 = vld [vmem:[#allocation2 + $0x140] sm:$0xff]
    %v129 = vld [vmem:[#allocation2 + $0x148] sm:$0xff]
    %v130 = vld [vmem:[#allocation2 + $0x150] sm:$0xff]
    %v131 = vld [vmem:[#allocation2 + $0x158] sm:$0xff]
    %v132 = vld [vmem:[#allocation2 + $0x160] sm:$0xff]
    %v133 = vld [vmem:[#allocation2 + $0x168] sm:$0xff]
    %v134 = vld [vmem:[#allocation2 + $0x170] sm:$0xff]
    %v135 = vld [vmem:[#allocation2 + $0x178] sm:$0xff]
    %v136 = vld [vmem:[#allocation2 + $0x180] sm:$0xff]
    %v137 = vld [vmem:[#allocation2 + $0x188] sm:$0xff]
    %v138 = vld [vmem:[#allocation2 + $0x190] sm:$0xff]
    %v139 = vld [vmem:[#allocation2 + $0x198] sm:$0xff]
    %v140 = vld [vmem:[#allocation2 + $0x1a0] sm:$0xff]
    %v141 = vld [vmem:[#allocation2 + $0x1a8] sm:$0xff]
    %v142 = vld [vmem:[#allocation2 + $0x1b0] sm:$0xff]
    %v143 = vld [vmem:[#allocation2 + $0x1b8] sm:$0xff]
    %v144 = vld [vmem:[#allocation2 + $0x1c0] sm:$0xff]
    %v145 = vld [vmem:[#allocation2 + $0x1c8] sm:$0xff]
    %v146 = vld [vmem:[#allocation2 + $0x1d0] sm:$0xff]
    %v147 = vld [vmem:[#allocation2 + $0x1d8] sm:$0xff]
    %v148 = vld [vmem:[#allocation2 + $0x1e0] sm:$0xff]
    %v149 = vld [vmem:[#allocation2 + $0x1e8] sm:$0xff]
    %v150 = vld [vmem:[#allocation2 + $0x1f0] sm:$0xff]
    %v151 = vld [vmem:[#allocation2 + $0x1f8] sm:$0xff]
    %v152 = vld [vmem:[#allocation2 + $0x200] sm:$0xff]
    %v153 = vld [vmem:[#allocation2 + $0x208] sm:$0xff]
    %v154 = vld [vmem:[#allocation2 + $0x210] sm:$0xff]
    %v155 = vld [vmem:[#allocation2 + $0x218] sm:$0xff]
    %v156 = vld [vmem:[#allocation2 + $0x220] sm:$0xff]
    %v157 = vld [vmem:[#allocation2 + $0x228] sm:$0xff]
    %v158 = vld [vmem:[#allocation2 + $0x230] sm:$0xff]
    %v159 = vld [vmem:[#allocation2 + $0x238] sm:$0xff]
    %v160 = vld [vmem:[#allocation2 + $0x240] sm:$0xff]
    %v161 = vld [vmem:[#allocation2 + $0x248] sm:$0xff]
    %v162 = vld [vmem:[#allocation2 + $0x250] sm:$0xff]
    %v163 = vld [vmem:[#allocation2 + $0x258] sm:$0xff]
    %v164 = vld [vmem:[#allocation2 + $0x260] sm:$0xff]
    %v165 = vld [vmem:[#allocation2 + $0x268] sm:$0xff]
    %v166 = vld [vmem:[#allocation2 + $0x270] sm:$0xff]
    %v167 = vld [vmem:[#allocation2 + $0x278] sm:$0xff]
    %v168 = vld [vmem:[#allocation2 + $0x280] sm:$0xff]
    %v169 = vld [vmem:[#allocation2 + $0x288] sm:$0xff]
    %v170 = vld [vmem:[#allocation2 + $0x290] sm:$0xff]
    %v171 = vld [vmem:[#allocation2 + $0x298] sm:$0xff]
    %v172 = vld [vmem:[#allocation2 + $0x2a0] sm:$0xff]
    %v173 = vld [vmem:[#allocation2 + $0x2a8] sm:$0xff]
    %v174 = vld [vmem:[#allocation2 + $0x2b0] sm:$0xff]
    %v175 = vld [vmem:[#allocation2 + $0x2b8] sm:$0xff]
    %v176 = vld [vmem:[#allocation2 + $0x2c0] sm:$0xff]
    %v177 = vld [vmem:[#allocation2 + $0x2c8] sm:$0xff]
    %v178 = vld [vmem:[#allocation2 + $0x2d0] sm:$0xff]
    %v179 = vld [vmem:[#allocation2 + $0x2d8] sm:$0xff]
    %v180 = vld [vmem:[#allocation2 + $0x2e0] sm:$0xff]
    %v181 = vld [vmem:[#allocation2 + $0x2e8] sm:$0xff]
    %v182 = vld [vmem:[#allocation2 + $0x2f0] sm:$0xff]
    %v183 = vld [vmem:[#allocation2 + $0x2f8] sm:$0xff]
    %v184 = vld [vmem:[#allocation2 + $0x300] sm:$0xff]
    %v185 = vld [vmem:[#allocation2 + $0x308] sm:$0xff]
    %v186 = vld [vmem:[#allocation2 + $0x310] sm:$0xff]
    %v187 = vld [vmem:[#allocation2 + $0x318] sm:$0xff]
    %v188 = vld [vmem:[#allocation2 + $0x320] sm:$0xff]
    %v189 = vld [vmem:[#allocation2 + $0x328] sm:$0xff]
    %v190 = vld [vmem:[#allocation2 + $0x330] sm:$0xff]
    %v191 = vld [vmem:[#allocation2 + $0x338] sm:$0xff]
    %v192 = vld [vmem:[#allocation2 + $0x340] sm:$0xff]
    %v193 = vld [vmem:[#allocation2 + $0x348] sm:$0xff]
    %v194 = vld [vmem:[#allocation2 + $0x350] sm:$0xff]
    %v195 = vld [vmem:[#allocation2 + $0x358] sm:$0xff]
    %v196 = vld [vmem:[#allocation2 + $0x360] sm:$0xff]
    %v197 = vld [vmem:[#allocation2 + $0x368] sm:$0xff]
    %v198 = vld [vmem:[#allocation2 + $0x370] sm:$0xff]
    %v199 = vld [vmem:[#allocation2 + $0x378] sm:$0xff]
    %v200 = vld [vmem:[#allocation2 + $0x380] sm:$0xff]
    %v201 = vld [vmem:[#allocation2 + $0x388] sm:$0xff]
    %v202 = vld [vmem:[#allocation2 + $0x390] sm:$0xff]
    %v203 = vld [vmem:[#allocation2 + $0x398] sm:$0xff]
    %v204 = vld [vmem:[#allocation2 + $0x3a0] sm:$0xff]
    %v205 = vld [vmem:[#allocation2 + $0x3a8] sm:$0xff]
    %v206 = vld [vmem:[#allocation2 + $0x3b0] sm:$0xff]
    %v207 = vld [vmem:[#allocation2 + $0x3b8] sm:$0xff]
    %v208 = vld [vmem:[#allocation2 + $0x3c0] sm:$0xff]
    %v209 = vld [vmem:[#allocation2 + $0x3c8] sm:$0xff]
    %v210 = vld [vmem:[#allocation2 + $0x3d0] sm:$0xff]
    %v211 = vld [vmem:[#allocation2 + $0x3d8] sm:$0xff]
    %v212 = vld [vmem:[#allocation2 + $0x3e0] sm:$0xff]
    %v213 = vld [vmem:[#allocation2 + $0x3e8] sm:$0xff]
    %v214 = vld [vmem:[#allocation2 + $0x3f0] sm:$0xff]
    %v215 = vld [vmem:[#allocation2 + $0x3f8] sm:$0xff]
    %v216 = vld [vmem:[#allocation2 + $0x400] sm:$0xff]
    %v217 = vld [vmem:[#allocation2 + $0x408] sm:$0xff]
    %v218 = vld [vmem:[#allocation2 + $0x410] sm:$0xff]
    %v219 = vld [vmem:[#allocation2 + $0x418] sm:$0xff]
    %v220 = vld [vmem:[#allocation2 + $0x420] sm:$0xff]
    %v221 = vld [vmem:[#allocation2 + $0x428] sm:$0xff]
    %v222 = vld [vmem:[#allocation2 + $0x430] sm:$0xff]
    %v223 = vld [vmem:[#allocation2 + $0x438] sm:$0xff]
    %v224 = vld [vmem:[#allocation2 + $0x440] sm:$0xff]
    %v225 = vld [vmem:[#allocation2 + $0x448] sm:$0xff]
    %v226 = vld [vmem:[#allocation2 + $0x450] sm:$0xff]
    %v227 = vld [vmem:[#allocation2 + $0x458] sm:$0xff]
    %v228 = vld [vmem:[#allocation2 + $0x460] sm:$0xff]
    %v229 = vld [vmem:[#allocation2 + $0x468] sm:$0xff]
    %v230 = vld [vmem:[#allocation2 + $0x470] sm:$0xff]
    %v231 = vld [vmem:[#allocation2 + $0x478] sm:$0xff]
    %v232 = vld [vmem:[#allocation2 + $0x480] sm:$0xff]
    %v233 = vld [vmem:[#allocation2 + $0x488] sm:$0xff]
    %v234 = vld [vmem:[#allocation2 + $0x490] sm:$0xff]
    %v235 = vld [vmem:[#allocation2 + $0x498] sm:$0xff]
    %v236 = vld [vmem:[#allocation2 + $0x4a0] sm:$0xff]
    %v237 = vld [vmem:[#allocation2 + $0x4a8] sm:$0xff]
    %v238 = vld [vmem:[#allocation2 + $0x4b0] sm:$0xff]
    %v239 = vld [vmem:[#allocation2 + $0x4b8] sm:$0xff]
    %v240 = vld [vmem:[#allocation2 + $0x4c0] sm:$0xff]
    %v241 = vld [vmem:[#allocation2 + $0x4c8] sm:$0xff]
    %v242 = vld [vmem:[#allocation2 + $0x4d0] sm:$0xff]
    %v243 = vld [vmem:[#allocation2 + $0x4d8] sm:$0xff]
    %v244 = vld [vmem:[#allocation2 + $0x4e0] sm:$0xff]
    %v245 = vld [vmem:[#allocation2 + $0x4e8] sm:$0xff]
    %v246 = vld [vmem:[#allocation2 + $0x4f0] sm:$0xff]
    %v247 = vld [vmem:[#allocation2 + $0x4f8] sm:$0xff]
    %v248 = vld [vmem:[#allocation2 + $0x500] sm:$0xff]
    %v249 = vld [vmem:[#allocation2 + $0x508] sm:$0xff]
    %v250 = vld [vmem:[#allocation2 + $0x510] sm:$0xff]
    %v251 = vld [vmem:[#allocation2 + $0x518] sm:$0xff]
    %v252 = vld [vmem:[#allocation2 + $0x520] sm:$0xff]
    %v253 = vld [vmem:[#allocation2 + $0x528] sm:$0xff]
    %v254 = vld [vmem:[#allocation2 + $0x530] sm:$0xff]
    %v255 = vld [vmem:[#allocation2 + $0x538] sm:$0xff]
    %v256 = vld [vmem:[#allocation2 + $0x540] sm:$0xff]
    %v257 = vld [vmem:[#allocation2 + $0x548] sm:$0xff]
    %v258 = vld [vmem:[#allocation2 + $0x550] sm:$0xff]
    %v259 = vld [vmem:[#allocation2 + $0x558] sm:$0xff]
    %v260 = vld [vmem:[#allocation2 + $0x560] sm:$0xff]
    %v261 = vld [vmem:[#allocation2 + $0x568] sm:$0xff]
    %v262 = vld [vmem:[#allocation2 + $0x570] sm:$0xff]
    %v263 = vld [vmem:[#allocation2 + $0x578] sm:$0xff]
    %v264 = vld [vmem:[#allocation2 + $0x580] sm:$0xff]
    %v265 = vld [vmem:[#allocation2 + $0x588] sm:$0xff]
    %v266 = vld [vmem:[#allocation2 + $0x590] sm:$0xff]
    %v267 = vld [vmem:[#allocation2 + $0x598] sm:$0xff]
    %v268 = vld [vmem:[#allocation2 + $0x5a0] sm:$0xff]
    %v269 = vld [vmem:[#allocation2 + $0x5a8] sm:$0xff]
    %v270 = vld [vmem:[#allocation2 + $0x5b0] sm:$0xff]
    %v271 = vld [vmem:[#allocation2 + $0x5b8] sm:$0xff]
    %v272 = vld [vmem:[#allocation2 + $0x5c0] sm:$0xff]
    %v273 = vld [vmem:[#allocation2 + $0x5c8] sm:$0xff]
    %v274 = vld [vmem:[#allocation2 + $0x5d0] sm:$0xff]
    %v275 = vld [vmem:[#allocation2 + $0x5d8] sm:$0xff]
    %v276 = vld [vmem:[#allocation2 + $0x5e0] sm:$0xff]
    %v277 = vld [vmem:[#allocation2 + $0x5e8] sm:$0xff]
    %v278 = vld [vmem:[#allocation2 + $0x5f0] sm:$0xff]
    %v279 = vld [vmem:[#allocation2 + $0x5f8] sm:$0xff]
    %v280 = vld [vmem:[#allocation2 + $0x600] sm:$0xff]
    %v281 = vld [vmem:[#allocation2 + $0x608] sm:$0xff]
    %v282 = vld [vmem:[#allocation2 + $0x610] sm:$0xff]
    %v283 = vld [vmem:[#allocation2 + $0x618] sm:$0xff]
    %v284 = vld [vmem:[#allocation2 + $0x620] sm:$0xff]
    %v285 = vld [vmem:[#allocation2 + $0x628] sm:$0xff]
    %v286 = vld [vmem:[#allocation2 + $0x630] sm:$0xff]
    %v287 = vld [vmem:[#allocation2 + $0x638] sm:$0xff]
    %v288 = vld [vmem:[#allocation2 + $0x640] sm:$0xff]
    %v289 = vld [vmem:[#allocation2 + $0x648] sm:$0xff]
    %v290 = vld [vmem:[#allocation2 + $0x650] sm:$0xff]
    %v291 = vld [vmem:[#allocation2 + $0x658] sm:$0xff]
    %v292 = vld [vmem:[#allocation2 + $0x660] sm:$0xff]
    %v293 = vld [vmem:[#allocation2 + $0x668] sm:$0xff]
    %v294 = vld [vmem:[#allocation2 + $0x670] sm:$0xff]
    %v295 = vld [vmem:[#allocation2 + $0x678] sm:$0xff]
    %v296 = vld [vmem:[#allocation2 + $0x680] sm:$0xff]
    %v297 = vld [vmem:[#allocation2 + $0x688] sm:$0xff]
    %v298 = vld [vmem:[#allocation2 + $0x690] sm:$0xff]
    %v299 = vld [vmem:[#allocation2 + $0x698] sm:$0xff]
    %v300 = vld [vmem:[#allocation2 + $0x6a0] sm:$0xff]
    %v301 = vld [vmem:[#allocation2 + $0x6a8] sm:$0xff]
    %v302 = vld [vmem:[#allocation2 + $0x6b0] sm:$0xff]
    %v303 = vld [vmem:[#allocation2 + $0x6b8] sm:$0xff]
    %v304 = vld [vmem:[#allocation2 + $0x6c0] sm:$0xff]
    %v305 = vld [vmem:[#allocation2 + $0x6c8] sm:$0xff]
    %v306 = vld [vmem:[#allocation2 + $0x6d0] sm:$0xff]
    %v307 = vld [vmem:[#allocation2 + $0x6d8] sm:$0xff]
    %v308 = vld [vmem:[#allocation2 + $0x6e0] sm:$0xff]
    %v309 = vld [vmem:[#allocation2 + $0x6e8] sm:$0xff]
    %v310 = vld [vmem:[#allocation2 + $0x6f0] sm:$0xff]
    %v311 = vld [vmem:[#allocation2 + $0x6f8] sm:$0xff]
    %v312 = vld [vmem:[%s2] sm:$0xf]
    %v314 = vlaneseq
    %v315 = vshrl.u32 %v314, 7
    %v316 = vsub.s32 0, %v315
    %v317 = vrot.slane %v312, %v316
    %v318 = vlaneseq
    %v319 = vshrl.u32 %v318, 7
    %v320 = vsub.s32 1, %v319
    %v321 = vrot.slane %v312, %v320
    %v322 = vlaneseq
    %v323 = vshrl.u32 %v322, 7
    %v324 = vsub.s32 2, %v323
    %v325 = vrot.slane %v312, %v324
    %v326 = vlaneseq
    %v327 = vshrl.u32 %v326, 7
    %v328 = vsub.s32 3, %v327
    %v329 = vrot.slane %v312, %v328
    %v342 = vunpack.c.l.b16 %v80
    %v343 = vunpack.c.h.b16 %v80
    %v344 = vunpack.c.l.b16 %v81
    %v345 = vunpack.c.h.b16 %v81
    %v346 = vunpack.c.l.b16 %v82
    %v347 = vunpack.c.h.b16 %v82
    %v348 = vunpack.c.l.b16 %v83
    %v349 = vunpack.c.l.b16 %v84
    %v350 = vunpack.c.h.b16 %v84
    %v351 = vunpack.c.l.b16 %v85
    %v352 = vunpack.c.h.b16 %v85
    %v353 = vunpack.c.l.b16 %v86
    %v354 = vunpack.c.h.b16 %v86
    %v355 = vunpack.c.l.b16 %v87
    %v356 = vpack.c.b16 %v349, %v342
    %v357 = vpack.c.b16 %v350, %v343
    %v358 = vpack.c.b16 %v351, %v344
    %v359 = vpack.c.b16 %v352, %v345
    %v360 = vpack.c.b16 %v353, %v346
    %v361 = vpack.c.b16 %v354, %v347
    %v362 = vpack.c.b16 %v355, %v348
    %v594 = vunpack.c.l.b16 %v88
    %v595 = vunpack.c.h.b16 %v88
    %v596 = vunpack.c.l.b16 %v89
    %v597 = vunpack.c.h.b16 %v89
    %v598 = vunpack.c.l.b16 %v90
    %v599 = vunpack.c.h.b16 %v90
    %v600 = vunpack.c.l.b16 %v91
    %v601 = vunpack.c.h.b16 %v91
    %v602 = vunpack.c.l.b16 %v92
    %v603 = vunpack.c.h.b16 %v92
    %v604 = vunpack.c.l.b16 %v93
    %v605 = vunpack.c.h.b16 %v93
    %v606 = vunpack.c.l.b16 %v94
    %v607 = vunpack.c.h.b16 %v94
    %v608 = vunpack.c.l.b16 %v95
    %v609 = vunpack.c.h.b16 %v95
    %v610 = vunpack.c.l.b16 %v96
    %v611 = vunpack.c.h.b16 %v96
    %v612 = vunpack.c.l.b16 %v97
    %v613 = vunpack.c.h.b16 %v97
    %v614 = vunpack.c.l.b16 %v98
    %v615 = vunpack.c.h.b16 %v98
    %v616 = vunpack.c.l.b16 %v99
    %v617 = vunpack.c.h.b16 %v99
    %v618 = vunpack.c.l.b16 %v100
    %v619 = vunpack.c.h.b16 %v100
    %v620 = vunpack.c.l.b16 %v101
    %v621 = vunpack.c.h.b16 %v101
    %v622 = vunpack.c.l.b16 %v102
    %v623 = vunpack.c.h.b16 %v102
    %v624 = vunpack.c.l.b16 %v103
    %v625 = vunpack.c.h.b16 %v103
    %v626 = vunpack.c.l.b16 %v104
    %v627 = vunpack.c.h.b16 %v104
    %v628 = vunpack.c.l.b16 %v105
    %v629 = vunpack.c.h.b16 %v105
    %v630 = vunpack.c.l.b16 %v106
    %v631 = vunpack.c.h.b16 %v106
    %v632 = vunpack.c.l.b16 %v107
    %v633 = vunpack.c.h.b16 %v107
    %v634 = vunpack.c.l.b16 %v108
    %v635 = vunpack.c.h.b16 %v108
    %v636 = vunpack.c.l.b16 %v109
    %v637 = vunpack.c.h.b16 %v109
    %v638 = vunpack.c.l.b16 %v110
    %v639 = vunpack.c.h.b16 %v110
    %v640 = vunpack.c.l.b16 %v111
    %v641 = vunpack.c.h.b16 %v111
    %v642 = vunpack.c.l.b16 %v112
    %v643 = vunpack.c.h.b16 %v112
    %v644 = vunpack.c.l.b16 %v113
    %v645 = vunpack.c.h.b16 %v113
    %v646 = vunpack.c.l.b16 %v114
    %v647 = vunpack.c.h.b16 %v114
    %v648 = vunpack.c.l.b16 %v115
    %v649 = vunpack.c.h.b16 %v115
    %v650 = vunpack.c.l.b16 %v116
    %v651 = vunpack.c.h.b16 %v116
    %v652 = vunpack.c.l.b16 %v117
    %v653 = vunpack.c.h.b16 %v117
    %v654 = vunpack.c.l.b16 %v118
    %v655 = vunpack.c.h.b16 %v118
    %v656 = vunpack.c.l.b16 %v119
    %v657 = vunpack.c.h.b16 %v119
    %v658 = vunpack.c.l.b16 %v120
    %v659 = vunpack.c.h.b16 %v120
    %v660 = vunpack.c.l.b16 %v121
    %v661 = vunpack.c.h.b16 %v121
    %v662 = vunpack.c.l.b16 %v122
    %v663 = vunpack.c.h.b16 %v122
    %v664 = vunpack.c.l.b16 %v123
    %v665 = vunpack.c.h.b16 %v123
    %v666 = vunpack.c.l.b16 %v124
    %v667 = vunpack.c.h.b16 %v124
    %v668 = vunpack.c.l.b16 %v125
    %v669 = vunpack.c.h.b16 %v125
    %v670 = vunpack.c.l.b16 %v126
    %v671 = vunpack.c.h.b16 %v126
    %v672 = vunpack.c.l.b16 %v127
    %v673 = vunpack.c.h.b16 %v127
    %v674 = vunpack.c.l.b16 %v128
    %v675 = vunpack.c.h.b16 %v128
    %v676 = vunpack.c.l.b16 %v129
    %v677 = vunpack.c.h.b16 %v129
    %v678 = vunpack.c.l.b16 %v130
    %v679 = vunpack.c.h.b16 %v130
    %v680 = vunpack.c.l.b16 %v131
    %v681 = vunpack.c.h.b16 %v131
    %v682 = vunpack.c.l.b16 %v132
    %v683 = vunpack.c.h.b16 %v132
    %v684 = vunpack.c.l.b16 %v133
    %v685 = vunpack.c.h.b16 %v133
    %v686 = vunpack.c.l.b16 %v134
    %v687 = vunpack.c.h.b16 %v134
    %v688 = vunpack.c.l.b16 %v135
    %v689 = vunpack.c.h.b16 %v135
    %v690 = vunpack.c.l.b16 %v136
    %v691 = vunpack.c.h.b16 %v136
    %v692 = vunpack.c.l.b16 %v137
    %v693 = vunpack.c.h.b16 %v137
    %v694 = vunpack.c.l.b16 %v138
    %v695 = vunpack.c.h.b16 %v138
    %v696 = vunpack.c.l.b16 %v139
    %v697 = vunpack.c.h.b16 %v139
    %v698 = vunpack.c.l.b16 %v140
    %v699 = vunpack.c.h.b16 %v140
    %v700 = vunpack.c.l.b16 %v141
    %v701 = vunpack.c.h.b16 %v141
    %v702 = vunpack.c.l.b16 %v142
    %v703 = vunpack.c.h.b16 %v142
    %v704 = vunpack.c.l.b16 %v143
    %v705 = vunpack.c.h.b16 %v143
    %v706 = vunpack.c.l.b16 %v144
    %v707 = vunpack.c.h.b16 %v144
    %v708 = vunpack.c.l.b16 %v145
    %v709 = vunpack.c.h.b16 %v145
    %v710 = vunpack.c.l.b16 %v146
    %v711 = vunpack.c.h.b16 %v146
    %v712 = vunpack.c.l.b16 %v147
    %v713 = vunpack.c.h.b16 %v147
    %v714 = vunpack.c.l.b16 %v148
    %v715 = vunpack.c.h.b16 %v148
    %v716 = vunpack.c.l.b16 %v149
    %v717 = vunpack.c.h.b16 %v149
    %v718 = vunpack.c.l.b16 %v150
    %v719 = vunpack.c.h.b16 %v150
    %v720 = vunpack.c.l.b16 %v151
    %v721 = vunpack.c.h.b16 %v151
    %v722 = vunpack.c.l.b16 %v152
    %v723 = vunpack.c.h.b16 %v152
    %v724 = vunpack.c.l.b16 %v153
    %v725 = vunpack.c.h.b16 %v153
    %v726 = vunpack.c.l.b16 %v154
    %v727 = vunpack.c.h.b16 %v154
    %v728 = vunpack.c.l.b16 %v155
    %v729 = vunpack.c.h.b16 %v155
    %v730 = vunpack.c.l.b16 %v156
    %v731 = vunpack.c.h.b16 %v156
    %v732 = vunpack.c.l.b16 %v157
    %v733 = vunpack.c.h.b16 %v157
    %v734 = vunpack.c.l.b16 %v158
    %v735 = vunpack.c.h.b16 %v158
    %v736 = vunpack.c.l.b16 %v159
    %v737 = vunpack.c.h.b16 %v159
    %v738 = vunpack.c.l.b16 %v160
    %v739 = vunpack.c.h.b16 %v160
    %v740 = vunpack.c.l.b16 %v161
    %v741 = vunpack.c.h.b16 %v161
    %v742 = vunpack.c.l.b16 %v162
    %v743 = vunpack.c.h.b16 %v162
    %v744 = vunpack.c.l.b16 %v163
    %v745 = vunpack.c.h.b16 %v163
    %v746 = vunpack.c.l.b16 %v164
    %v747 = vunpack.c.h.b16 %v164
    %v748 = vunpack.c.l.b16 %v165
    %v749 = vunpack.c.h.b16 %v165
    %v750 = vunpack.c.l.b16 %v166
    %v751 = vunpack.c.h.b16 %v166
    %v752 = vunpack.c.l.b16 %v167
    %v753 = vunpack.c.h.b16 %v167
    %v754 = vunpack.c.l.b16 %v168
    %v755 = vunpack.c.h.b16 %v168
    %v756 = vunpack.c.l.b16 %v169
    %v757 = vunpack.c.h.b16 %v169
    %v758 = vunpack.c.l.b16 %v170
    %v759 = vunpack.c.h.b16 %v170
    %v760 = vunpack.c.l.b16 %v171
    %v761 = vunpack.c.h.b16 %v171
    %v762 = vunpack.c.l.b16 %v172
    %v763 = vunpack.c.h.b16 %v172
    %v764 = vunpack.c.l.b16 %v173
    %v765 = vunpack.c.h.b16 %v173
    %v766 = vunpack.c.l.b16 %v174
    %v767 = vunpack.c.h.b16 %v174
    %v768 = vunpack.c.l.b16 %v175
    %v769 = vunpack.c.h.b16 %v175
    %v770 = vunpack.c.l.b16 %v176
    %v771 = vunpack.c.h.b16 %v176
    %v772 = vunpack.c.l.b16 %v177
    %v773 = vunpack.c.h.b16 %v177
    %v774 = vunpack.c.l.b16 %v178
    %v775 = vunpack.c.h.b16 %v178
    %v776 = vunpack.c.l.b16 %v179
    %v777 = vunpack.c.h.b16 %v179
    %v778 = vunpack.c.l.b16 %v180
    %v779 = vunpack.c.h.b16 %v180
    %v780 = vunpack.c.l.b16 %v181
    %v781 = vunpack.c.h.b16 %v181
    %v782 = vunpack.c.l.b16 %v182
    %v783 = vunpack.c.h.b16 %v182
    %v784 = vunpack.c.l.b16 %v183
    %v785 = vunpack.c.h.b16 %v183
    %v786 = vunpack.c.l.b16 %v184
    %v787 = vunpack.c.h.b16 %v184
    %v788 = vunpack.c.l.b16 %v185
    %v789 = vunpack.c.h.b16 %v185
    %v790 = vunpack.c.l.b16 %v186
    %v791 = vunpack.c.h.b16 %v186
    %v792 = vunpack.c.l.b16 %v187
    %v793 = vunpack.c.h.b16 %v187
    %v794 = vunpack.c.l.b16 %v188
    %v795 = vunpack.c.h.b16 %v188
    %v796 = vunpack.c.l.b16 %v189
    %v797 = vunpack.c.h.b16 %v189
    %v798 = vunpack.c.l.b16 %v190
    %v799 = vunpack.c.h.b16 %v190
    %v800 = vunpack.c.l.b16 %v191
    %v801 = vunpack.c.h.b16 %v191
    %v802 = vunpack.c.l.b16 %v192
    %v803 = vunpack.c.h.b16 %v192
    %v804 = vunpack.c.l.b16 %v193
    %v805 = vunpack.c.h.b16 %v193
    %v806 = vunpack.c.l.b16 %v194
    %v807 = vunpack.c.h.b16 %v194
    %v808 = vunpack.c.l.b16 %v195
    %v809 = vunpack.c.h.b16 %v195
    %v810 = vunpack.c.l.b16 %v196
    %v811 = vunpack.c.h.b16 %v196
    %v812 = vunpack.c.l.b16 %v197
    %v813 = vunpack.c.h.b16 %v197
    %v814 = vunpack.c.l.b16 %v198
    %v815 = vunpack.c.h.b16 %v198
    %v816 = vunpack.c.l.b16 %v199
    %v817 = vunpack.c.h.b16 %v199
    %v818 = vunpack.c.l.b16 %v200
    %v819 = vunpack.c.h.b16 %v200
    %v820 = vunpack.c.l.b16 %v201
    %v821 = vunpack.c.h.b16 %v201
    %v822 = vunpack.c.l.b16 %v202
    %v823 = vunpack.c.h.b16 %v202
    %v824 = vunpack.c.l.b16 %v203
    %v825 = vunpack.c.h.b16 %v203
    %v826 = vunpack.c.l.b16 %v204
    %v827 = vunpack.c.h.b16 %v204
    %v828 = vunpack.c.l.b16 %v205
    %v829 = vunpack.c.h.b16 %v205
    %v830 = vunpack.c.l.b16 %v206
    %v831 = vunpack.c.h.b16 %v206
    %v832 = vunpack.c.l.b16 %v207
    %v833 = vunpack.c.h.b16 %v207
    %v834 = vunpack.c.l.b16 %v208
    %v835 = vunpack.c.h.b16 %v208
    %v836 = vunpack.c.l.b16 %v209
    %v837 = vunpack.c.h.b16 %v209
    %v838 = vunpack.c.l.b16 %v210
    %v839 = vunpack.c.h.b16 %v210
    %v840 = vunpack.c.l.b16 %v211
    %v841 = vunpack.c.h.b16 %v211
    %v842 = vunpack.c.l.b16 %v212
    %v843 = vunpack.c.h.b16 %v212
    %v844 = vunpack.c.l.b16 %v213
    %v845 = vunpack.c.h.b16 %v213
    %v846 = vunpack.c.l.b16 %v214
    %v847 = vunpack.c.h.b16 %v214
    %v848 = vunpack.c.l.b16 %v215
    %v849 = vunpack.c.h.b16 %v215
    %v850 = vunpack.c.l.b16 %v216
    %v851 = vunpack.c.h.b16 %v216
    %v852 = vunpack.c.l.b16 %v217
    %v853 = vunpack.c.h.b16 %v217
    %v854 = vunpack.c.l.b16 %v218
    %v855 = vunpack.c.h.b16 %v218
    %v856 = vunpack.c.l.b16 %v219
    %v857 = vunpack.c.h.b16 %v219
    %v858 = vunpack.c.l.b16 %v220
    %v859 = vunpack.c.h.b16 %v220
    %v860 = vunpack.c.l.b16 %v221
    %v861 = vunpack.c.h.b16 %v221
    %v862 = vunpack.c.l.b16 %v222
    %v863 = vunpack.c.h.b16 %v222
    %v864 = vunpack.c.l.b16 %v223
    %v865 = vunpack.c.h.b16 %v223
    %v866 = vunpack.c.l.b16 %v224
    %v867 = vunpack.c.h.b16 %v224
    %v868 = vunpack.c.l.b16 %v225
    %v869 = vunpack.c.h.b16 %v225
    %v870 = vunpack.c.l.b16 %v226
    %v871 = vunpack.c.h.b16 %v226
    %v872 = vunpack.c.l.b16 %v227
    %v873 = vunpack.c.h.b16 %v227
    %v874 = vunpack.c.l.b16 %v228
    %v875 = vunpack.c.h.b16 %v228
    %v876 = vunpack.c.l.b16 %v229
    %v877 = vunpack.c.h.b16 %v229
    %v878 = vunpack.c.l.b16 %v230
    %v879 = vunpack.c.h.b16 %v230
    %v880 = vunpack.c.l.b16 %v231
    %v881 = vunpack.c.h.b16 %v231
    %v882 = vunpack.c.l.b16 %v232
    %v883 = vunpack.c.h.b16 %v232
    %v884 = vunpack.c.l.b16 %v233
    %v885 = vunpack.c.h.b16 %v233
    %v886 = vunpack.c.l.b16 %v234
    %v887 = vunpack.c.h.b16 %v234
    %v888 = vunpack.c.l.b16 %v235
    %v889 = vunpack.c.h.b16 %v235
    %v890 = vunpack.c.l.b16 %v236
    %v891 = vunpack.c.h.b16 %v236
    %v892 = vunpack.c.l.b16 %v237
    %v893 = vunpack.c.h.b16 %v237
    %v894 = vunpack.c.l.b16 %v238
    %v895 = vunpack.c.h.b16 %v238
    %v896 = vunpack.c.l.b16 %v239
    %v897 = vunpack.c.h.b16 %v239
    %v898 = vunpack.c.l.b16 %v240
    %v899 = vunpack.c.h.b16 %v240
    %v900 = vunpack.c.l.b16 %v241
    %v901 = vunpack.c.h.b16 %v241
    %v902 = vunpack.c.l.b16 %v242
    %v903 = vunpack.c.h.b16 %v242
    %v904 = vunpack.c.l.b16 %v243
    %v905 = vunpack.c.h.b16 %v243
    %v906 = vunpack.c.l.b16 %v244
    %v907 = vunpack.c.h.b16 %v244
    %v908 = vunpack.c.l.b16 %v245
    %v909 = vunpack.c.h.b16 %v245
    %v910 = vunpack.c.l.b16 %v246
    %v911 = vunpack.c.h.b16 %v246
    %v912 = vunpack.c.l.b16 %v247
    %v913 = vunpack.c.h.b16 %v247
    %v914 = vunpack.c.l.b16 %v248
    %v915 = vunpack.c.h.b16 %v248
    %v916 = vunpack.c.l.b16 %v249
    %v917 = vunpack.c.h.b16 %v249
    %v918 = vunpack.c.l.b16 %v250
    %v919 = vunpack.c.h.b16 %v250
    %v920 = vunpack.c.l.b16 %v251
    %v921 = vunpack.c.h.b16 %v251
    %v922 = vunpack.c.l.b16 %v252
    %v923 = vunpack.c.h.b16 %v252
    %v924 = vunpack.c.l.b16 %v253
    %v925 = vunpack.c.h.b16 %v253
    %v926 = vunpack.c.l.b16 %v254
    %v927 = vunpack.c.h.b16 %v254
    %v928 = vunpack.c.l.b16 %v255
    %v929 = vunpack.c.h.b16 %v255
    %v930 = vunpack.c.l.b16 %v256
    %v931 = vunpack.c.h.b16 %v256
    %v932 = vunpack.c.l.b16 %v257
    %v933 = vunpack.c.h.b16 %v257
    %v934 = vunpack.c.l.b16 %v258
    %v935 = vunpack.c.h.b16 %v258
    %v936 = vunpack.c.l.b16 %v259
    %v937 = vunpack.c.h.b16 %v259
    %v938 = vunpack.c.l.b16 %v260
    %v939 = vunpack.c.h.b16 %v260
    %v940 = vunpack.c.l.b16 %v261
    %v941 = vunpack.c.h.b16 %v261
    %v942 = vunpack.c.l.b16 %v262
    %v943 = vunpack.c.h.b16 %v262
    %v944 = vunpack.c.l.b16 %v263
    %v945 = vunpack.c.h.b16 %v263
    %v946 = vunpack.c.l.b16 %v264
    %v947 = vunpack.c.h.b16 %v264
    %v948 = vunpack.c.l.b16 %v265
    %v949 = vunpack.c.h.b16 %v265
    %v950 = vunpack.c.l.b16 %v266
    %v951 = vunpack.c.h.b16 %v266
    %v952 = vunpack.c.l.b16 %v267
    %v953 = vunpack.c.h.b16 %v267
    %v954 = vunpack.c.l.b16 %v268
    %v955 = vunpack.c.h.b16 %v268
    %v956 = vunpack.c.l.b16 %v269
    %v957 = vunpack.c.h.b16 %v269
    %v958 = vunpack.c.l.b16 %v270
    %v959 = vunpack.c.h.b16 %v270
    %v960 = vunpack.c.l.b16 %v271
    %v961 = vunpack.c.h.b16 %v271
    %v962 = vunpack.c.l.b16 %v272
    %v963 = vunpack.c.h.b16 %v272
    %v964 = vunpack.c.l.b16 %v273
    %v965 = vunpack.c.h.b16 %v273
    %v966 = vunpack.c.l.b16 %v274
    %v967 = vunpack.c.h.b16 %v274
    %v968 = vunpack.c.l.b16 %v275
    %v969 = vunpack.c.h.b16 %v275
    %v970 = vunpack.c.l.b16 %v276
    %v971 = vunpack.c.h.b16 %v276
    %v972 = vunpack.c.l.b16 %v277
    %v973 = vunpack.c.h.b16 %v277
    %v974 = vunpack.c.l.b16 %v278
    %v975 = vunpack.c.h.b16 %v278
    %v976 = vunpack.c.l.b16 %v279
    %v977 = vunpack.c.h.b16 %v279
    %v978 = vunpack.c.l.b16 %v280
    %v979 = vunpack.c.h.b16 %v280
    %v980 = vunpack.c.l.b16 %v281
    %v981 = vunpack.c.h.b16 %v281
    %v982 = vunpack.c.l.b16 %v282
    %v983 = vunpack.c.h.b16 %v282
    %v984 = vunpack.c.l.b16 %v283
    %v985 = vunpack.c.h.b16 %v283
    %v986 = vunpack.c.l.b16 %v284
    %v987 = vunpack.c.h.b16 %v284
    %v988 = vunpack.c.l.b16 %v285
    %v989 = vunpack.c.h.b16 %v285
    %v990 = vunpack.c.l.b16 %v286
    %v991 = vunpack.c.h.b16 %v286
    %v992 = vunpack.c.l.b16 %v287
    %v993 = vunpack.c.h.b16 %v287
    %v994 = vunpack.c.l.b16 %v288
    %v995 = vunpack.c.h.b16 %v288
    %v996 = vunpack.c.l.b16 %v289
    %v997 = vunpack.c.h.b16 %v289
    %v998 = vunpack.c.l.b16 %v290
    %v999 = vunpack.c.h.b16 %v290
    %v1000 = vunpack.c.l.b16 %v291
    %v1001 = vunpack.c.h.b16 %v291
    %v1002 = vunpack.c.l.b16 %v292
    %v1003 = vunpack.c.h.b16 %v292
    %v1004 = vunpack.c.l.b16 %v293
    %v1005 = vunpack.c.h.b16 %v293
    %v1006 = vunpack.c.l.b16 %v294
    %v1007 = vunpack.c.h.b16 %v294
    %v1008 = vunpack.c.l.b16 %v295
    %v1009 = vunpack.c.h.b16 %v295
    %v1010 = vunpack.c.l.b16 %v296
    %v1011 = vunpack.c.h.b16 %v296
    %v1012 = vunpack.c.l.b16 %v297
    %v1013 = vunpack.c.h.b16 %v297
    %v1014 = vunpack.c.l.b16 %v298
    %v1015 = vunpack.c.h.b16 %v298
    %v1016 = vunpack.c.l.b16 %v299
    %v1017 = vunpack.c.h.b16 %v299
    %v1018 = vunpack.c.l.b16 %v300
    %v1019 = vunpack.c.h.b16 %v300
    %v1020 = vunpack.c.l.b16 %v301
    %v1021 = vunpack.c.h.b16 %v301
    %v1022 = vunpack.c.l.b16 %v302
    %v1023 = vunpack.c.h.b16 %v302
    %v1024 = vunpack.c.l.b16 %v303
    %v1025 = vunpack.c.h.b16 %v303
    %v1026 = vunpack.c.l.b16 %v304
    %v1027 = vunpack.c.h.b16 %v304
    %v1028 = vunpack.c.l.b16 %v305
    %v1029 = vunpack.c.h.b16 %v305
    %v1030 = vunpack.c.l.b16 %v306
    %v1031 = vunpack.c.h.b16 %v306
    %v1032 = vunpack.c.l.b16 %v307
    %v1033 = vunpack.c.h.b16 %v307
    %v1034 = vunpack.c.l.b16 %v308
    %v1035 = vunpack.c.h.b16 %v308
    %v1036 = vunpack.c.l.b16 %v309
    %v1037 = vunpack.c.h.b16 %v309
    %v1038 = vunpack.c.l.b16 %v310
    %v1039 = vunpack.c.h.b16 %v310
    %v1040 = vunpack.c.l.b16 %v311
    %v1041 = vunpack.c.h.b16 %v311
    %v1042 = vpack.c.b16 %v598, %v594
    %v1043 = vpack.c.b16 %v599, %v595
    %v1044 = vpack.c.b16 %v600, %v596
    %v1045 = vpack.c.b16 %v601, %v597
    %v1046 = vpack.c.b16 %v606, %v602
    %v1047 = vpack.c.b16 %v607, %v603
    %v1048 = vpack.c.b16 %v608, %v604
    %v1049 = vpack.c.b16 %v609, %v605
    %v1050 = vpack.c.b16 %v614, %v610
    %v1051 = vpack.c.b16 %v615, %v611
    %v1052 = vpack.c.b16 %v616, %v612
    %v1053 = vpack.c.b16 %v617, %v613
    %v1054 = vpack.c.b16 %v622, %v618
    %v1055 = vpack.c.b16 %v623, %v619
    %v1056 = vpack.c.b16 %v624, %v620
    %v1057 = vpack.c.b16 %v625, %v621
    %v1058 = vpack.c.b16 %v630, %v626
    %v1059 = vpack.c.b16 %v631, %v627
    %v1060 = vpack.c.b16 %v632, %v628
    %v1061 = vpack.c.b16 %v633, %v629
    %v1062 = vpack.c.b16 %v638, %v634
    %v1063 = vpack.c.b16 %v639, %v635
    %v1064 = vpack.c.b16 %v640, %v636
    %v1065 = vpack.c.b16 %v641, %v637
    %v1066 = vpack.c.b16 %v646, %v642
    %v1067 = vpack.c.b16 %v647, %v643
    %v1068 = vpack.c.b16 %v648, %v644
    %v1069 = vpack.c.b16 %v649, %v645
    %v1070 = vpack.c.b16 %v654, %v650
    %v1071 = vpack.c.b16 %v655, %v651
    %v1072 = vpack.c.b16 %v656, %v652
    %v1073 = vpack.c.b16 %v657, %v653
    %v1074 = vpack.c.b16 %v662, %v658
    %v1075 = vpack.c.b16 %v663, %v659
    %v1076 = vpack.c.b16 %v664, %v660
    %v1077 = vpack.c.b16 %v665, %v661
    %v1078 = vpack.c.b16 %v670, %v666
    %v1079 = vpack.c.b16 %v671, %v667
    %v1080 = vpack.c.b16 %v672, %v668
    %v1081 = vpack.c.b16 %v673, %v669
    %v1082 = vpack.c.b16 %v678, %v674
    %v1083 = vpack.c.b16 %v679, %v675
    %v1084 = vpack.c.b16 %v680, %v676
    %v1085 = vpack.c.b16 %v681, %v677
    %v1086 = vpack.c.b16 %v686, %v682
    %v1087 = vpack.c.b16 %v687, %v683
    %v1088 = vpack.c.b16 %v688, %v684
    %v1089 = vpack.c.b16 %v689, %v685
    %v1090 = vpack.c.b16 %v694, %v690
    %v1091 = vpack.c.b16 %v695, %v691
    %v1092 = vpack.c.b16 %v696, %v692
    %v1093 = vpack.c.b16 %v697, %v693
    %v1094 = vpack.c.b16 %v702, %v698
    %v1095 = vpack.c.b16 %v703, %v699
    %v1096 = vpack.c.b16 %v704, %v700
    %v1097 = vpack.c.b16 %v705, %v701
    %v1098 = vpack.c.b16 %v710, %v706
    %v1099 = vpack.c.b16 %v711, %v707
    %v1100 = vpack.c.b16 %v712, %v708
    %v1101 = vpack.c.b16 %v713, %v709
    %v1102 = vpack.c.b16 %v718, %v714
    %v1103 = vpack.c.b16 %v719, %v715
    %v1104 = vpack.c.b16 %v720, %v716
    %v1105 = vpack.c.b16 %v721, %v717
    %v1106 = vpack.c.b16 %v726, %v722
    %v1107 = vpack.c.b16 %v727, %v723
    %v1108 = vpack.c.b16 %v728, %v724
    %v1109 = vpack.c.b16 %v729, %v725
    %v1110 = vpack.c.b16 %v734, %v730
    %v1111 = vpack.c.b16 %v735, %v731
    %v1112 = vpack.c.b16 %v736, %v732
    %v1113 = vpack.c.b16 %v737, %v733
    %v1114 = vpack.c.b16 %v742, %v738
    %v1115 = vpack.c.b16 %v743, %v739
    %v1116 = vpack.c.b16 %v744, %v740
    %v1117 = vpack.c.b16 %v745, %v741
    %v1118 = vpack.c.b16 %v750, %v746
    %v1119 = vpack.c.b16 %v751, %v747
    %v1120 = vpack.c.b16 %v752, %v748
    %v1121 = vpack.c.b16 %v753, %v749
    %v1122 = vpack.c.b16 %v758, %v754
    %v1123 = vpack.c.b16 %v759, %v755
    %v1124 = vpack.c.b16 %v760, %v756
    %v1125 = vpack.c.b16 %v761, %v757
    %v1126 = vpack.c.b16 %v766, %v762
    %v1127 = vpack.c.b16 %v767, %v763
    %v1128 = vpack.c.b16 %v768, %v764
    %v1129 = vpack.c.b16 %v769, %v765
    %v1130 = vpack.c.b16 %v774, %v770
    %v1131 = vpack.c.b16 %v775, %v771
    %v1132 = vpack.c.b16 %v776, %v772
    %v1133 = vpack.c.b16 %v777, %v773
    %v1134 = vpack.c.b16 %v782, %v778
    %v1135 = vpack.c.b16 %v783, %v779
    %v1136 = vpack.c.b16 %v784, %v780
    %v1137 = vpack.c.b16 %v785, %v781
    %v1138 = vpack.c.b16 %v790, %v786
    %v1139 = vpack.c.b16 %v791, %v787
    %v1140 = vpack.c.b16 %v792, %v788
    %v1141 = vpack.c.b16 %v793, %v789
    %v1142 = vpack.c.b16 %v798, %v794
    %v1143 = vpack.c.b16 %v799, %v795
    %v1144 = vpack.c.b16 %v800, %v796
    %v1145 = vpack.c.b16 %v801, %v797
    %v1146 = vpack.c.b16 %v806, %v802
    %v1147 = vpack.c.b16 %v807, %v803
    %v1148 = vpack.c.b16 %v808, %v804
    %v1149 = vpack.c.b16 %v809, %v805
    %v1150 = vpack.c.b16 %v814, %v810
    %v1151 = vpack.c.b16 %v815, %v811
    %v1152 = vpack.c.b16 %v816, %v812
    %v1153 = vpack.c.b16 %v817, %v813
    %v1154 = vpack.c.b16 %v822, %v818
    %v1155 = vpack.c.b16 %v823, %v819
    %v1156 = vpack.c.b16 %v824, %v820
    %v1157 = vpack.c.b16 %v825, %v821
    %v1158 = vpack.c.b16 %v830, %v826
    %v1159 = vpack.c.b16 %v831, %v827
    %v1160 = vpack.c.b16 %v832, %v828
    %v1161 = vpack.c.b16 %v833, %v829
    %v1162 = vpack.c.b16 %v838, %v834
    %v1163 = vpack.c.b16 %v839, %v835
    %v1164 = vpack.c.b16 %v840, %v836
    %v1165 = vpack.c.b16 %v841, %v837
    %v1166 = vpack.c.b16 %v846, %v842
    %v1167 = vpack.c.b16 %v847, %v843
    %v1168 = vpack.c.b16 %v848, %v844
    %v1169 = vpack.c.b16 %v849, %v845
    %v1170 = vpack.c.b16 %v854, %v850
    %v1171 = vpack.c.b16 %v855, %v851
    %v1172 = vpack.c.b16 %v856, %v852
    %v1173 = vpack.c.b16 %v857, %v853
    %v1174 = vpack.c.b16 %v862, %v858
    %v1175 = vpack.c.b16 %v863, %v859
    %v1176 = vpack.c.b16 %v864, %v860
    %v1177 = vpack.c.b16 %v865, %v861
    %v1178 = vpack.c.b16 %v870, %v866
    %v1179 = vpack.c.b16 %v871, %v867
    %v1180 = vpack.c.b16 %v872, %v868
    %v1181 = vpack.c.b16 %v873, %v869
    %v1182 = vpack.c.b16 %v878, %v874
    %v1183 = vpack.c.b16 %v879, %v875
    %v1184 = vpack.c.b16 %v880, %v876
    %v1185 = vpack.c.b16 %v881, %v877
    %v1186 = vpack.c.b16 %v886, %v882
    %v1187 = vpack.c.b16 %v887, %v883
    %v1188 = vpack.c.b16 %v888, %v884
    %v1189 = vpack.c.b16 %v889, %v885
    %v1190 = vpack.c.b16 %v894, %v890
    %v1191 = vpack.c.b16 %v895, %v891
    %v1192 = vpack.c.b16 %v896, %v892
    %v1193 = vpack.c.b16 %v897, %v893
    %v1194 = vpack.c.b16 %v902, %v898
    %v1195 = vpack.c.b16 %v903, %v899
    %v1196 = vpack.c.b16 %v904, %v900
    %v1197 = vpack.c.b16 %v905, %v901
    %v1198 = vpack.c.b16 %v910, %v906
    %v1199 = vpack.c.b16 %v911, %v907
    %v1200 = vpack.c.b16 %v912, %v908
    %v1201 = vpack.c.b16 %v913, %v909
    %v1202 = vpack.c.b16 %v918, %v914
    %v1203 = vpack.c.b16 %v919, %v915
    %v1204 = vpack.c.b16 %v920, %v916
    %v1205 = vpack.c.b16 %v921, %v917
    %v1206 = vpack.c.b16 %v926, %v922
    %v1207 = vpack.c.b16 %v927, %v923
    %v1208 = vpack.c.b16 %v928, %v924
    %v1209 = vpack.c.b16 %v929, %v925
    %v1210 = vpack.c.b16 %v934, %v930
    %v1211 = vpack.c.b16 %v935, %v931
    %v1212 = vpack.c.b16 %v936, %v932
    %v1213 = vpack.c.b16 %v937, %v933
    %v1214 = vpack.c.b16 %v942, %v938
    %v1215 = vpack.c.b16 %v943, %v939
    %v1216 = vpack.c.b16 %v944, %v940
    %v1217 = vpack.c.b16 %v945, %v941
    %v1218 = vpack.c.b16 %v950, %v946
    %v1219 = vpack.c.b16 %v951, %v947
    %v1220 = vpack.c.b16 %v952, %v948
    %v1221 = vpack.c.b16 %v953, %v949
    %v1222 = vpack.c.b16 %v958, %v954
    %v1223 = vpack.c.b16 %v959, %v955
    %v1224 = vpack.c.b16 %v960, %v956
    %v1225 = vpack.c.b16 %v961, %v957
    %v1226 = vpack.c.b16 %v966, %v962
    %v1227 = vpack.c.b16 %v967, %v963
    %v1228 = vpack.c.b16 %v968, %v964
    %v1229 = vpack.c.b16 %v969, %v965
    %v1230 = vpack.c.b16 %v974, %v970
    %v1231 = vpack.c.b16 %v975, %v971
    %v1232 = vpack.c.b16 %v976, %v972
    %v1233 = vpack.c.b16 %v977, %v973
    %v1234 = vpack.c.b16 %v982, %v978
    %v1235 = vpack.c.b16 %v983, %v979
    %v1236 = vpack.c.b16 %v984, %v980
    %v1237 = vpack.c.b16 %v985, %v981
    %v1238 = vpack.c.b16 %v990, %v986
    %v1239 = vpack.c.b16 %v991, %v987
    %v1240 = vpack.c.b16 %v992, %v988
    %v1241 = vpack.c.b16 %v993, %v989
    %v1242 = vpack.c.b16 %v998, %v994
    %v1243 = vpack.c.b16 %v999, %v995
    %v1244 = vpack.c.b16 %v1000, %v996
    %v1245 = vpack.c.b16 %v1001, %v997
    %v1246 = vpack.c.b16 %v1006, %v1002
    %v1247 = vpack.c.b16 %v1007, %v1003
    %v1248 = vpack.c.b16 %v1008, %v1004
    %v1249 = vpack.c.b16 %v1009, %v1005
    %v1250 = vpack.c.b16 %v1014, %v1010
    %v1251 = vpack.c.b16 %v1015, %v1011
    %v1252 = vpack.c.b16 %v1016, %v1012
    %v1253 = vpack.c.b16 %v1017, %v1013
    %v1254 = vpack.c.b16 %v1022, %v1018
    %v1255 = vpack.c.b16 %v1023, %v1019
    %v1256 = vpack.c.b16 %v1024, %v1020
    %v1257 = vpack.c.b16 %v1025, %v1021
    %v1258 = vpack.c.b16 %v1030, %v1026
    %v1259 = vpack.c.b16 %v1031, %v1027
    %v1260 = vpack.c.b16 %v1032, %v1028
    %v1261 = vpack.c.b16 %v1033, %v1029
    %v1262 = vpack.c.b16 %v1038, %v1034
    %v1263 = vpack.c.b16 %v1039, %v1035
    %v1264 = vpack.c.b16 %v1040, %v1036
    %v1265 = vpack.c.b16 %v1041, %v1037
    %1490 = vmatprep.subr.bf16.mxu0 %v1071
    %1491 = vmatpush1.bf16.msra.mxu0 %v1070
    %1492 = vmatprep.subr.bf16.mxu0 %v1067
    %1493 = vmatpush1.bf16.msra.mxu0 %v1066
    %1494 = vmatprep.subr.bf16.mxu0 %v1063
    %1495 = vmatpush1.bf16.msra.mxu0 %v1062
    %1496 = vmatprep.subr.bf16.mxu0 %v1059
    %1497 = vmatpush1.bf16.msra.mxu0 %v1058
    %1498 = vmatprep.subr.bf16.mxu0 %v1055
    %1499 = vmatpush1.bf16.msra.mxu0 %v1054
    %1500 = vmatprep.subr.bf16.mxu0 %v1051
    %1501 = vmatpush1.bf16.msra.mxu0 %v1050
    %1502 = vmatprep.subr.bf16.mxu0 %v1047
    %1503 = vmatpush1.bf16.msra.mxu0 %v1046
    %1504 = vmatprep.subr.bf16.mxu0 %v1043
    %1505 = vmatpush1.bf16.msra.mxu0 %v1042
    %1506 = vmatprep.subr.bf16.mxu0 %v1103
    %1507 = vmatpush2.bf16.msra.mxu0 %v1102
    %1508 = vmatprep.subr.bf16.mxu0 %v1099
    %1509 = vmatpush2.bf16.msra.mxu0 %v1098
    %1510 = vmatprep.subr.bf16.mxu0 %v1095
    %1511 = vmatpush2.bf16.msra.mxu0 %v1094
    %1512 = vmatprep.subr.bf16.mxu0 %v1091
    %1513 = vmatpush2.bf16.msra.mxu0 %v1090
    %1514 = vmatprep.subr.bf16.mxu0 %v1087
    %1515 = vmatpush2.bf16.msra.mxu0 %v1086
    %1516 = vmatprep.subr.bf16.mxu0 %v1083
    %1517 = vmatpush2.bf16.msra.mxu0 %v1082
    %1518 = vmatprep.subr.bf16.mxu0 %v1079
    %1519 = vmatpush2.bf16.msra.mxu0 %v1078
    %1520 = vmatprep.subr.bf16.mxu0 %v1075
    %1521 = vmatpush2.bf16.msra.mxu0 %v1074
    %1522 = vmatprep.mubr.bf16.mxu0 %v357
    %1523 = vmatmul.mubr.bf16.gmra.mxu0 %v356
    %v1524 = vpop.f32.mrf.mxu0
    %v1525 = vadd.f32 %v317, %v1524
    %v1526 = vpop.f32.mrf.mxu0
    %v1527 = vadd.f32 %v321, %v1526
    %v1528 = vpop.f32.mrf.mxu0
    %v1529 = vadd.f32 %v317, %v1528
    %v1530 = vpop.f32.mrf.mxu0
    %v1531 = vadd.f32 %v321, %v1530
    %1532 = vdwg.mxu0
    %1533 = vmatprep.subr.bf16.mxu0 %v1135
    %1534 = vmatpush1.bf16.msra.mxu0 %v1134
    %1535 = vmatprep.subr.bf16.mxu0 %v1131
    %1536 = vmatpush1.bf16.msra.mxu0 %v1130
    %1537 = vmatprep.subr.bf16.mxu0 %v1127
    %1538 = vmatpush1.bf16.msra.mxu0 %v1126
    %1539 = vmatprep.subr.bf16.mxu0 %v1123
    %1540 = vmatpush1.bf16.msra.mxu0 %v1122
    %1541 = vmatprep.subr.bf16.mxu0 %v1119
    %1542 = vmatpush1.bf16.msra.mxu0 %v1118
    %1543 = vmatprep.subr.bf16.mxu0 %v1115
    %1544 = vmatpush1.bf16.msra.mxu0 %v1114
    %1545 = vmatprep.subr.bf16.mxu0 %v1111
    %1546 = vmatpush1.bf16.msra.mxu0 %v1110
    %1547 = vmatprep.subr.bf16.mxu0 %v1107
    %1548 = vmatpush1.bf16.msra.mxu0 %v1106
    %1549 = vmatprep.subr.bf16.mxu0 %v1167
    %1550 = vmatpush2.bf16.msra.mxu0 %v1166
    %1551 = vmatprep.subr.bf16.mxu0 %v1163
    %1552 = vmatpush2.bf16.msra.mxu0 %v1162
    %1553 = vmatprep.subr.bf16.mxu0 %v1159
    %1554 = vmatpush2.bf16.msra.mxu0 %v1158
    %1555 = vmatprep.subr.bf16.mxu0 %v1155
    %1556 = vmatpush2.bf16.msra.mxu0 %v1154
    %1557 = vmatprep.subr.bf16.mxu0 %v1151
    %1558 = vmatpush2.bf16.msra.mxu0 %v1150
    %1559 = vmatprep.subr.bf16.mxu0 %v1147
    %1560 = vmatpush2.bf16.msra.mxu0 %v1146
    %1561 = vmatprep.subr.bf16.mxu0 %v1143
    %1562 = vmatpush2.bf16.msra.mxu0 %v1142
    %1563 = vmatprep.subr.bf16.mxu0 %v1139
    %1564 = vmatpush2.bf16.msra.mxu0 %v1138
    %1565 = vmatprep.mubr.bf16.mxu0 %v359
    %1566 = vmatmul.mubr.bf16.gmra.mxu0 %v358
    %v1567 = vpop.f32.mrf.mxu0
    %v1568 = vadd.f32 %v1525, %v1567
    %v1569 = vpop.f32.mrf.mxu0
    %v1570 = vadd.f32 %v1527, %v1569
    %v1571 = vpop.f32.mrf.mxu0
    %v1572 = vadd.f32 %v1529, %v1571
    %v1573 = vpop.f32.mrf.mxu0
    %v1574 = vadd.f32 %v1531, %v1573
    %1575 = vdwg.mxu0
    %1576 = vmatprep.subr.bf16.mxu0 %v1199
    %1577 = vmatpush1.bf16.msra.mxu0 %v1198
    %1578 = vmatprep.subr.bf16.mxu0 %v1195
    %1579 = vmatpush1.bf16.msra.mxu0 %v1194
    %1580 = vmatprep.subr.bf16.mxu0 %v1191
    %1581 = vmatpush1.bf16.msra.mxu0 %v1190
    %1582 = vmatprep.subr.bf16.mxu0 %v1187
    %1583 = vmatpush1.bf16.msra.mxu0 %v1186
    %1584 = vmatprep.subr.bf16.mxu0 %v1183
    %1585 = vmatpush1.bf16.msra.mxu0 %v1182
    %1586 = vmatprep.subr.bf16.mxu0 %v1179
    %1587 = vmatpush1.bf16.msra.mxu0 %v1178
    %1588 = vmatprep.subr.bf16.mxu0 %v1175
    %1589 = vmatpush1.bf16.msra.mxu0 %v1174
    %1590 = vmatprep.subr.bf16.mxu0 %v1171
    %1591 = vmatpush1.bf16.msra.mxu0 %v1170
    %1592 = vmatprep.subr.bf16.mxu0 %v1231
    %1593 = vmatpush2.bf16.msra.mxu0 %v1230
    %1594 = vmatprep.subr.bf16.mxu0 %v1227
    %1595 = vmatpush2.bf16.msra.mxu0 %v1226
    %1596 = vmatprep.subr.bf16.mxu0 %v1223
    %1597 = vmatpush2.bf16.msra.mxu0 %v1222
    %1598 = vmatprep.subr.bf16.mxu0 %v1219
    %1599 = vmatpush2.bf16.msra.mxu0 %v1218
    %1600 = vmatprep.subr.bf16.mxu0 %v1215
    %1601 = vmatpush2.bf16.msra.mxu0 %v1214
    %1602 = vmatprep.subr.bf16.mxu0 %v1211
    %1603 = vmatpush2.bf16.msra.mxu0 %v1210
    %1604 = vmatprep.subr.bf16.mxu0 %v1207
    %1605 = vmatpush2.bf16.msra.mxu0 %v1206
    %1606 = vmatprep.subr.bf16.mxu0 %v1203
    %1607 = vmatpush2.bf16.msra.mxu0 %v1202
    %1608 = vmatprep.mubr.bf16.mxu0 %v361
    %1609 = vmatmul.mubr.bf16.gmra.mxu0 %v360
    %v1610 = vpop.f32.mrf.mxu0
    %v1611 = vadd.f32 %v1568, %v1610
    %v1612 = vpop.f32.mrf.mxu0
    %v1613 = vadd.f32 %v1570, %v1612
    %v1614 = vpop.f32.mrf.mxu0
    %v1615 = vadd.f32 %v1572, %v1614
    %v1616 = vpop.f32.mrf.mxu0
    %v1617 = vadd.f32 %v1574, %v1616
    %1618 = vdwg.mxu0
    %1619 = vmatprep.subr.bf16.mxu0 %v1263
    %1620 = vmatpush1.bf16.msra.mxu0 %v1262
    %1621 = vmatprep.subr.bf16.mxu0 %v1259
    %1622 = vmatpush1.bf16.msra.mxu0 %v1258
    %1623 = vmatprep.subr.bf16.mxu0 %v1255
    %1624 = vmatpush1.bf16.msra.mxu0 %v1254
    %1625 = vmatprep.subr.bf16.mxu0 %v1251
    %1626 = vmatpush1.bf16.msra.mxu0 %v1250
    %1627 = vmatprep.subr.bf16.mxu0 %v1247
    %1628 = vmatpush1.bf16.msra.mxu0 %v1246
    %1629 = vmatprep.subr.bf16.mxu0 %v1243
    %1630 = vmatpush1.bf16.msra.mxu0 %v1242
    %1631 = vmatprep.subr.bf16.mxu0 %v1239
    %1632 = vmatpush1.bf16.msra.mxu0 %v1238
    %1633 = vmatprep.subr.bf16.mxu0 %v1235
    %1634 = vmatpush1.bf16.msra.mxu0 %v1234
    %1635 = vmatprep.subr.bf16.mxu0 0
    %1636 = vmatpush2.bf16.msra.mxu0 0
    %1637 = vmatprep.subr.bf16.mxu0 0
    %1638 = vmatpush2.bf16.msra.mxu0 0
    %1639 = vmatprep.subr.bf16.mxu0 0
    %1640 = vmatpush2.bf16.msra.mxu0 0
    %1641 = vmatprep.subr.bf16.mxu0 0
    %1642 = vmatpush2.bf16.msra.mxu0 0
    %1643 = vmatprep.subr.bf16.mxu0 0
    %1644 = vmatpush2.bf16.msra.mxu0 0
    %1645 = vmatprep.subr.bf16.mxu0 0
    %1646 = vmatpush2.bf16.msra.mxu0 0
    %1647 = vmatprep.subr.bf16.mxu0 0
    %1648 = vmatpush2.bf16.msra.mxu0 0
    %1649 = vmatprep.subr.bf16.mxu0 0
    %1650 = vmatpush2.bf16.msra.mxu0 0
    %1651 = vmatprep.mubr.bf16.mxu0 0
    %1652 = vmatmul.mubr.bf16.gmra.mxu0 %v362
    %v1653 = vpop.f32.mrf.mxu0
    %v1654 = vadd.f32 %v1611, %v1653
    %v1655 = vpop.f32.mrf.mxu0
    %v1656 = vadd.f32 %v1613, %v1655
    %v1657 = vpop.f32.mrf.mxu0
    %v1658 = vadd.f32 %v1615, %v1657
    %v1659 = vpop.f32.mrf.mxu0
    %v1660 = vadd.f32 %v1617, %v1659
    %1661 = vdwg.mxu0
    %1662 = vmatprep.subr.bf16.mxu0 %v1073
    %1663 = vmatpush1.bf16.msra.mxu0 %v1072
    %1664 = vmatprep.subr.bf16.mxu0 %v1069
    %1665 = vmatpush1.bf16.msra.mxu0 %v1068
    %1666 = vmatprep.subr.bf16.mxu0 %v1065
    %1667 = vmatpush1.bf16.msra.mxu0 %v1064
    %1668 = vmatprep.subr.bf16.mxu0 %v1061
    %1669 = vmatpush1.bf16.msra.mxu0 %v1060
    %1670 = vmatprep.subr.bf16.mxu0 %v1057
    %1671 = vmatpush1.bf16.msra.mxu0 %v1056
    %1672 = vmatprep.subr.bf16.mxu0 %v1053
    %1673 = vmatpush1.bf16.msra.mxu0 %v1052
    %1674 = vmatprep.subr.bf16.mxu0 %v1049
    %1675 = vmatpush1.bf16.msra.mxu0 %v1048
    %1676 = vmatprep.subr.bf16.mxu0 %v1045
    %1677 = vmatpush1.bf16.msra.mxu0 %v1044
    %1678 = vmatprep.subr.bf16.mxu0 %v1105
    %1679 = vmatpush2.bf16.msra.mxu0 %v1104
    %1680 = vmatprep.subr.bf16.mxu0 %v1101
    %1681 = vmatpush2.bf16.msra.mxu0 %v1100
    %1682 = vmatprep.subr.bf16.mxu0 %v1097
    %1683 = vmatpush2.bf16.msra.mxu0 %v1096
    %1684 = vmatprep.subr.bf16.mxu0 %v1093
    %1685 = vmatpush2.bf16.msra.mxu0 %v1092
    %1686 = vmatprep.subr.bf16.mxu0 %v1089
    %1687 = vmatpush2.bf16.msra.mxu0 %v1088
    %1688 = vmatprep.subr.bf16.mxu0 %v1085
    %1689 = vmatpush2.bf16.msra.mxu0 %v1084
    %1690 = vmatprep.subr.bf16.mxu0 %v1081
    %1691 = vmatpush2.bf16.msra.mxu0 %v1080
    %1692 = vmatprep.subr.bf16.mxu0 %v1077
    %1693 = vmatpush2.bf16.msra.mxu0 %v1076
    %1694 = vmatprep.mubr.bf16.mxu0 %v357
    %1695 = vmatmul.mubr.bf16.gmra.mxu0 %v356
    %v1696 = vpop.f32.mrf.mxu0
    %v1697 = vadd.f32 %v325, %v1696
    %v1698 = vpop.f32.mrf.mxu0
    %v1699 = vadd.f32 %v329, %v1698
    %v1700 = vpop.f32.mrf.mxu0
    %v1701 = vadd.f32 %v325, %v1700
    %v1702 = vpop.f32.mrf.mxu0
    %v1703 = vadd.f32 %v329, %v1702
    %1704 = vdwg.mxu0
    %1705 = vmatprep.subr.bf16.mxu0 %v1137
    %1706 = vmatpush1.bf16.msra.mxu0 %v1136
    %1707 = vmatprep.subr.bf16.mxu0 %v1133
    %1708 = vmatpush1.bf16.msra.mxu0 %v1132
    %1709 = vmatprep.subr.bf16.mxu0 %v1129
    %1710 = vmatpush1.bf16.msra.mxu0 %v1128
    %1711 = vmatprep.subr.bf16.mxu0 %v1125
    %1712 = vmatpush1.bf16.msra.mxu0 %v1124
    %1713 = vmatprep.subr.bf16.mxu0 %v1121
    %1714 = vmatpush1.bf16.msra.mxu0 %v1120
    %1715 = vmatprep.subr.bf16.mxu0 %v1117
    %1716 = vmatpush1.bf16.msra.mxu0 %v1116
    %1717 = vmatprep.subr.bf16.mxu0 %v1113
    %1718 = vmatpush1.bf16.msra.mxu0 %v1112
    %1719 = vmatprep.subr.bf16.mxu0 %v1109
    %1720 = vmatpush1.bf16.msra.mxu0 %v1108
    %1721 = vmatprep.subr.bf16.mxu0 %v1169
    %1722 = vmatpush2.bf16.msra.mxu0 %v1168
    %1723 = vmatprep.subr.bf16.mxu0 %v1165
    %1724 = vmatpush2.bf16.msra.mxu0 %v1164
    %1725 = vmatprep.subr.bf16.mxu0 %v1161
    %1726 = vmatpush2.bf16.msra.mxu0 %v1160
    %1727 = vmatprep.subr.bf16.mxu0 %v1157
    %1728 = vmatpush2.bf16.msra.mxu0 %v1156
    %1729 = vmatprep.subr.bf16.mxu0 %v1153
    %1730 = vmatpush2.bf16.msra.mxu0 %v1152
    %1731 = vmatprep.subr.bf16.mxu0 %v1149
    %1732 = vmatpush2.bf16.msra.mxu0 %v1148
    %1733 = vmatprep.subr.bf16.mxu0 %v1145
    %1734 = vmatpush2.bf16.msra.mxu0 %v1144
    %1735 = vmatprep.subr.bf16.mxu0 %v1141
    %1736 = vmatpush2.bf16.msra.mxu0 %v1140
    %1737 = vmatprep.mubr.bf16.mxu0 %v359
    %1738 = vmatmul.mubr.bf16.gmra.mxu0 %v358
    %v1739 = vpop.f32.mrf.mxu0
    %v1740 = vadd.f32 %v1697, %v1739
    %v1741 = vpop.f32.mrf.mxu0
    %v1742 = vadd.f32 %v1699, %v1741
    %v1743 = vpop.f32.mrf.mxu0
    %v1744 = vadd.f32 %v1701, %v1743
    %v1745 = vpop.f32.mrf.mxu0
    %v1746 = vadd.f32 %v1703, %v1745
    %1747 = vdwg.mxu0
    %1748 = vmatprep.subr.bf16.mxu0 %v1201
    %1749 = vmatpush1.bf16.msra.mxu0 %v1200
    %1750 = vmatprep.subr.bf16.mxu0 %v1197
    %1751 = vmatpush1.bf16.msra.mxu0 %v1196
    %1752 = vmatprep.subr.bf16.mxu0 %v1193
    %1753 = vmatpush1.bf16.msra.mxu0 %v1192
    %1754 = vmatprep.subr.bf16.mxu0 %v1189
    %1755 = vmatpush1.bf16.msra.mxu0 %v1188
    %1756 = vmatprep.subr.bf16.mxu0 %v1185
    %1757 = vmatpush1.bf16.msra.mxu0 %v1184
    %1758 = vmatprep.subr.bf16.mxu0 %v1181
    %1759 = vmatpush1.bf16.msra.mxu0 %v1180
    %1760 = vmatprep.subr.bf16.mxu0 %v1177
    %1761 = vmatpush1.bf16.msra.mxu0 %v1176
    %1762 = vmatprep.subr.bf16.mxu0 %v1173
    %1763 = vmatpush1.bf16.msra.mxu0 %v1172
    %1764 = vmatprep.subr.bf16.mxu0 %v1233
    %1765 = vmatpush2.bf16.msra.mxu0 %v1232
    %1766 = vmatprep.subr.bf16.mxu0 %v1229
    %1767 = vmatpush2.bf16.msra.mxu0 %v1228
    %1768 = vmatprep.subr.bf16.mxu0 %v1225
    %1769 = vmatpush2.bf16.msra.mxu0 %v1224
    %1770 = vmatprep.subr.bf16.mxu0 %v1221
    %1771 = vmatpush2.bf16.msra.mxu0 %v1220
    %1772 = vmatprep.subr.bf16.mxu0 %v1217
    %1773 = vmatpush2.bf16.msra.mxu0 %v1216
    %1774 = vmatprep.subr.bf16.mxu0 %v1213
    %1775 = vmatpush2.bf16.msra.mxu0 %v1212
    %1776 = vmatprep.subr.bf16.mxu0 %v1209
    %1777 = vmatpush2.bf16.msra.mxu0 %v1208
    %1778 = vmatprep.subr.bf16.mxu0 %v1205
    %1779 = vmatpush2.bf16.msra.mxu0 %v1204
    %1780 = vmatprep.mubr.bf16.mxu0 %v361
    %1781 = vmatmul.mubr.bf16.gmra.mxu0 %v360
    %v1782 = vpop.f32.mrf.mxu0
    %v1783 = vadd.f32 %v1740, %v1782
    %v1784 = vpop.f32.mrf.mxu0
    %v1785 = vadd.f32 %v1742, %v1784
    %v1786 = vpop.f32.mrf.mxu0
    %v1787 = vadd.f32 %v1744, %v1786
    %v1788 = vpop.f32.mrf.mxu0
    %v1789 = vadd.f32 %v1746, %v1788
    %1790 = vdwg.mxu0
    %1791 = vmatprep.subr.bf16.mxu0 %v1265
    %1792 = vmatpush1.bf16.msra.mxu0 %v1264
    %1793 = vmatprep.subr.bf16.mxu0 %v1261
    %1794 = vmatpush1.bf16.msra.mxu0 %v1260
    %1795 = vmatprep.subr.bf16.mxu0 %v1257
    %1796 = vmatpush1.bf16.msra.mxu0 %v1256
    %1797 = vmatprep.subr.bf16.mxu0 %v1253
    %1798 = vmatpush1.bf16.msra.mxu0 %v1252
    %1799 = vmatprep.subr.bf16.mxu0 %v1249
    %1800 = vmatpush1.bf16.msra.mxu0 %v1248
    %1801 = vmatprep.subr.bf16.mxu0 %v1245
    %1802 = vmatpush1.bf16.msra.mxu0 %v1244
    %1803 = vmatprep.subr.bf16.mxu0 %v1241
    %1804 = vmatpush1.bf16.msra.mxu0 %v1240
    %1805 = vmatprep.subr.bf16.mxu0 %v1237
    %1806 = vmatpush1.bf16.msra.mxu0 %v1236
    %1807 = vmatprep.subr.bf16.mxu0 0
    %1808 = vmatpush2.bf16.msra.mxu0 0
    %1809 = vmatprep.subr.bf16.mxu0 0
    %1810 = vmatpush2.bf16.msra.mxu0 0
    %1811 = vmatprep.subr.bf16.mxu0 0
    %1812 = vmatpush2.bf16.msra.mxu0 0
    %1813 = vmatprep.subr.bf16.mxu0 0
    %1814 = vmatpush2.bf16.msra.mxu0 0
    %1815 = vmatprep.subr.bf16.mxu0 0
    %1816 = vmatpush2.bf16.msra.mxu0 0
    %1817 = vmatprep.subr.bf16.mxu0 0
    %1818 = vmatpush2.bf16.msra.mxu0 0
    %1819 = vmatprep.subr.bf16.mxu0 0
    %1820 = vmatpush2.bf16.msra.mxu0 0
    %1821 = vmatprep.subr.bf16.mxu0 0
    %1822 = vmatpush2.bf16.msra.mxu0 0
    %1823 = vmatprep.mubr.bf16.mxu0 0
    %1824 = vmatmul.mubr.bf16.gmra.mxu0 %v362
    %v1825 = vpop.f32.mrf.mxu0
    %v1826 = vadd.f32 %v1783, %v1825
    %v1827 = vpop.f32.mrf.mxu0
    %v1828 = vadd.f32 %v1785, %v1827
    %v1829 = vpop.f32.mrf.mxu0
    %v1830 = vadd.f32 %v1787, %v1829
    %v1831 = vpop.f32.mrf.mxu0
    %v1832 = vadd.f32 %v1789, %v1831
    %1833 = vdwg.mxu0
    %v1834 = vmax.f32 %v1654, 0.0
    %v1835 = vmax.f32 %v1656, 0.0
    %v1836 = vmax.f32 %v1826, 0.0
    %v1837 = vmax.f32 %v1828, 0.0
    %v1838 = vmax.f32 %v1658, 0.0
    %v1839 = vmax.f32 %v1660, 0.0
    %v1840 = vmax.f32 %v1830, 0.0
    %v1841 = vmax.f32 %v1832, 0.0
    %v1842 = vpack.c.bf16 %v1838, %v1834
    %v1843 = vpack.c.bf16 %v1839, %v1835
    %v1844 = vpack.c.bf16 %v1840, %v1836
    %v1845 = vpack.c.bf16 %v1841, %v1837
    %v1846 = vld [vmem:[%s3] sm:$0xff]
    %v1847 = vld [vmem:[%s3 + $0x8] sm:$0xff]
    %v1848 = vld [vmem:[%s3 + $0x10] sm:$0xff]
    %v1849 = vld [vmem:[%s3 + $0x18] sm:$0xff]
    %v1850 = vld [vmem:[%s3 + $0x20] sm:$0xff]
    %v1851 = vld [vmem:[%s3 + $0x28] sm:$0xff]
    %v1852 = vld [vmem:[%s3 + $0x30] sm:$0xff]
    %v1853 = vld [vmem:[%s3 + $0x38] sm:$0xff]
    %v1854 = vld [vmem:[%s3 + $0x40] sm:$0xff]
    %v1855 = vld [vmem:[%s3 + $0x48] sm:$0xff]
    %v1856 = vld [vmem:[%s3 + $0x50] sm:$0xff]
    %v1857 = vld [vmem:[%s3 + $0x58] sm:$0xff]
    %v1858 = vld [vmem:[%s3 + $0x60] sm:$0xff]
    %v1859 = vld [vmem:[%s3 + $0x68] sm:$0xff]
    %v1860 = vld [vmem:[%s3 + $0x70] sm:$0xff]
    %v1861 = vld [vmem:[%s3 + $0x78] sm:$0xff]
    %v1862 = vld [vmem:[%s3 + $0x80] sm:$0xff]
    %v1863 = vld [vmem:[%s3 + $0x88] sm:$0xff]
    %v1864 = vld [vmem:[%s3 + $0x90] sm:$0xff]
    %v1865 = vld [vmem:[%s3 + $0x98] sm:$0xff]
    %v1866 = vld [vmem:[%s3 + $0xa0] sm:$0xff]
    %v1867 = vld [vmem:[%s3 + $0xa8] sm:$0xff]
    %v1868 = vld [vmem:[%s3 + $0xb0] sm:$0xff]
    %v1869 = vld [vmem:[%s3 + $0xb8] sm:$0xff]
    %v1870 = vld [vmem:[%s3 + $0xc0] sm:$0xff]
    %v1871 = vld [vmem:[%s3 + $0xc8] sm:$0xff]
    %v1872 = vld [vmem:[%s3 + $0xd0] sm:$0xff]
    %v1873 = vld [vmem:[%s3 + $0xd8] sm:$0xff]
    %v1874 = vld [vmem:[%s3 + $0xe0] sm:$0xff]
    %v1875 = vld [vmem:[%s3 + $0xe8] sm:$0xff]
    %v1876 = vld [vmem:[%s3 + $0xf0] sm:$0xff]
    %v1877 = vld [vmem:[%s3 + $0xf8] sm:$0xff]
    %v1878 = vld [vmem:[%s3 + $0x100] sm:$0xff]
    %v1879 = vld [vmem:[%s3 + $0x108] sm:$0xff]
    %v1880 = vld [vmem:[%s3 + $0x110] sm:$0xff]
    %v1881 = vld [vmem:[%s3 + $0x118] sm:$0xff]
    %v1882 = vld [vmem:[%s3 + $0x120] sm:$0xff]
    %v1883 = vld [vmem:[%s3 + $0x128] sm:$0xff]
    %v1884 = vld [vmem:[%s3 + $0x130] sm:$0xff]
    %v1885 = vld [vmem:[%s3 + $0x138] sm:$0xff]
    %v1886 = vld [vmem:[%s3 + $0x140] sm:$0xff]
    %v1887 = vld [vmem:[%s3 + $0x148] sm:$0xff]
    %v1888 = vld [vmem:[%s3 + $0x150] sm:$0xff]
    %v1889 = vld [vmem:[%s3 + $0x158] sm:$0xff]
    %v1890 = vld [vmem:[%s3 + $0x160] sm:$0xff]
    %v1891 = vld [vmem:[%s3 + $0x168] sm:$0xff]
    %v1892 = vld [vmem:[%s3 + $0x170] sm:$0xff]
    %v1893 = vld [vmem:[%s3 + $0x178] sm:$0xff]
    %v1894 = vld [vmem:[%s3 + $0x180] sm:$0xff]
    %v1895 = vld [vmem:[%s3 + $0x188] sm:$0xff]
    %v1896 = vld [vmem:[%s3 + $0x190] sm:$0xff]
    %v1897 = vld [vmem:[%s3 + $0x198] sm:$0xff]
    %v1898 = vld [vmem:[%s3 + $0x1a0] sm:$0xff]
    %v1899 = vld [vmem:[%s3 + $0x1a8] sm:$0xff]
    %v1900 = vld [vmem:[%s3 + $0x1b0] sm:$0xff]
    %v1901 = vld [vmem:[%s3 + $0x1b8] sm:$0xff]
    %v1902 = vld [vmem:[%s3 + $0x1c0] sm:$0xff]
    %v1903 = vld [vmem:[%s3 + $0x1c8] sm:$0xff]
    %v1904 = vld [vmem:[%s3 + $0x1d0] sm:$0xff]
    %v1905 = vld [vmem:[%s3 + $0x1d8] sm:$0xff]
    %v1906 = vld [vmem:[%s3 + $0x1e0] sm:$0xff]
    %v1907 = vld [vmem:[%s3 + $0x1e8] sm:$0xff]
    %v1908 = vld [vmem:[%s3 + $0x1f0] sm:$0xff]
    %v1909 = vld [vmem:[%s3 + $0x1f8] sm:$0xff]
    %v1910 = vld [vmem:[%s4] sm:$0x3]
    %v1912 = vlaneseq
    %v1913 = vshrl.u32 %v1912, 7
    %v1914 = vsub.s32 0, %v1913
    %v1915 = vrot.slane %v1910, %v1914
    %v1916 = vlaneseq
    %v1917 = vshrl.u32 %v1916, 7
    %v1918 = vsub.s32 1, %v1917
    %v1919 = vrot.slane %v1910, %v1918
    %v1986 = vunpack.c.l.b16 %v1846
    %v1987 = vunpack.c.h.b16 %v1846
    %v1988 = vunpack.c.l.b16 %v1847
    %v1989 = vunpack.c.h.b16 %v1847
    %v1990 = vunpack.c.l.b16 %v1848
    %v1991 = vunpack.c.h.b16 %v1848
    %v1992 = vunpack.c.l.b16 %v1849
    %v1993 = vunpack.c.h.b16 %v1849
    %v1994 = vunpack.c.l.b16 %v1850
    %v1995 = vunpack.c.h.b16 %v1850
    %v1996 = vunpack.c.l.b16 %v1851
    %v1997 = vunpack.c.h.b16 %v1851
    %v1998 = vunpack.c.l.b16 %v1852
    %v1999 = vunpack.c.h.b16 %v1852
    %v2000 = vunpack.c.l.b16 %v1853
    %v2001 = vunpack.c.h.b16 %v1853
    %v2002 = vunpack.c.l.b16 %v1854
    %v2003 = vunpack.c.h.b16 %v1854
    %v2004 = vunpack.c.l.b16 %v1855
    %v2005 = vunpack.c.h.b16 %v1855
    %v2006 = vunpack.c.l.b16 %v1856
    %v2007 = vunpack.c.h.b16 %v1856
    %v2008 = vunpack.c.l.b16 %v1857
    %v2009 = vunpack.c.h.b16 %v1857
    %v2010 = vunpack.c.l.b16 %v1858
    %v2011 = vunpack.c.h.b16 %v1858
    %v2012 = vunpack.c.l.b16 %v1859
    %v2013 = vunpack.c.h.b16 %v1859
    %v2014 = vunpack.c.l.b16 %v1860
    %v2015 = vunpack.c.h.b16 %v1860
    %v2016 = vunpack.c.l.b16 %v1861
    %v2017 = vunpack.c.h.b16 %v1861
    %v2018 = vunpack.c.l.b16 %v1862
    %v2019 = vunpack.c.h.b16 %v1862
    %v2020 = vunpack.c.l.b16 %v1863
    %v2021 = vunpack.c.h.b16 %v1863
    %v2022 = vunpack.c.l.b16 %v1864
    %v2023 = vunpack.c.h.b16 %v1864
    %v2024 = vunpack.c.l.b16 %v1865
    %v2025 = vunpack.c.h.b16 %v1865
    %v2026 = vunpack.c.l.b16 %v1866
    %v2027 = vunpack.c.h.b16 %v1866
    %v2028 = vunpack.c.l.b16 %v1867
    %v2029 = vunpack.c.h.b16 %v1867
    %v2030 = vunpack.c.l.b16 %v1868
    %v2031 = vunpack.c.h.b16 %v1868
    %v2032 = vunpack.c.l.b16 %v1869
    %v2033 = vunpack.c.h.b16 %v1869
    %v2034 = vunpack.c.l.b16 %v1870
    %v2035 = vunpack.c.h.b16 %v1870
    %v2036 = vunpack.c.l.b16 %v1871
    %v2037 = vunpack.c.h.b16 %v1871
    %v2038 = vunpack.c.l.b16 %v1872
    %v2039 = vunpack.c.h.b16 %v1872
    %v2040 = vunpack.c.l.b16 %v1873
    %v2041 = vunpack.c.h.b16 %v1873
    %v2042 = vunpack.c.l.b16 %v1874
    %v2043 = vunpack.c.h.b16 %v1874
    %v2044 = vunpack.c.l.b16 %v1875
    %v2045 = vunpack.c.h.b16 %v1875
    %v2046 = vunpack.c.l.b16 %v1876
    %v2047 = vunpack.c.h.b16 %v1876
    %v2048 = vunpack.c.l.b16 %v1877
    %v2049 = vunpack.c.h.b16 %v1877
    %v2050 = vunpack.c.l.b16 %v1878
    %v2051 = vunpack.c.h.b16 %v1878
    %v2052 = vunpack.c.l.b16 %v1879
    %v2053 = vunpack.c.h.b16 %v1879
    %v2054 = vunpack.c.l.b16 %v1880
    %v2055 = vunpack.c.h.b16 %v1880
    %v2056 = vunpack.c.l.b16 %v1881
    %v2057 = vunpack.c.h.b16 %v1881
    %v2058 = vunpack.c.l.b16 %v1882
    %v2059 = vunpack.c.h.b16 %v1882
    %v2060 = vunpack.c.l.b16 %v1883
    %v2061 = vunpack.c.h.b16 %v1883
    %v2062 = vunpack.c.l.b16 %v1884
    %v2063 = vunpack.c.h.b16 %v1884
    %v2064 = vunpack.c.l.b16 %v1885
    %v2065 = vunpack.c.h.b16 %v1885
    %v2066 = vunpack.c.l.b16 %v1886
    %v2067 = vunpack.c.h.b16 %v1886
    %v2068 = vunpack.c.l.b16 %v1887
    %v2069 = vunpack.c.h.b16 %v1887
    %v2070 = vunpack.c.l.b16 %v1888
    %v2071 = vunpack.c.h.b16 %v1888
    %v2072 = vunpack.c.l.b16 %v1889
    %v2073 = vunpack.c.h.b16 %v1889
    %v2074 = vunpack.c.l.b16 %v1890
    %v2075 = vunpack.c.h.b16 %v1890
    %v2076 = vunpack.c.l.b16 %v1891
    %v2077 = vunpack.c.h.b16 %v1891
    %v2078 = vunpack.c.l.b16 %v1892
    %v2079 = vunpack.c.h.b16 %v1892
    %v2080 = vunpack.c.l.b16 %v1893
    %v2081 = vunpack.c.h.b16 %v1893
    %v2082 = vunpack.c.l.b16 %v1894
    %v2083 = vunpack.c.h.b16 %v1894
    %v2084 = vunpack.c.l.b16 %v1895
    %v2085 = vunpack.c.h.b16 %v1895
    %v2086 = vunpack.c.l.b16 %v1896
    %v2087 = vunpack.c.h.b16 %v1896
    %v2088 = vunpack.c.l.b16 %v1897
    %v2089 = vunpack.c.h.b16 %v1897
    %v2090 = vunpack.c.l.b16 %v1898
    %v2091 = vunpack.c.h.b16 %v1898
    %v2092 = vunpack.c.l.b16 %v1899
    %v2093 = vunpack.c.h.b16 %v1899
    %v2094 = vunpack.c.l.b16 %v1900
    %v2095 = vunpack.c.h.b16 %v1900
    %v2096 = vunpack.c.l.b16 %v1901
    %v2097 = vunpack.c.h.b16 %v1901
    %v2098 = vunpack.c.l.b16 %v1902
    %v2099 = vunpack.c.h.b16 %v1902
    %v2100 = vunpack.c.l.b16 %v1903
    %v2101 = vunpack.c.h.b16 %v1903
    %v2102 = vunpack.c.l.b16 %v1904
    %v2103 = vunpack.c.h.b16 %v1904
    %v2104 = vunpack.c.l.b16 %v1905
    %v2105 = vunpack.c.h.b16 %v1905
    %v2106 = vunpack.c.l.b16 %v1906
    %v2107 = vunpack.c.h.b16 %v1906
    %v2108 = vunpack.c.l.b16 %v1907
    %v2109 = vunpack.c.h.b16 %v1907
    %v2110 = vunpack.c.l.b16 %v1908
    %v2111 = vunpack.c.h.b16 %v1908
    %v2112 = vunpack.c.l.b16 %v1909
    %v2113 = vunpack.c.h.b16 %v1909
    %v2114 = vpack.c.b16 %v1988, %v1986
    %v2115 = vpack.c.b16 %v1989, %v1987
    %v2116 = vpack.c.b16 %v1992, %v1990
    %v2117 = vpack.c.b16 %v1993, %v1991
    %v2118 = vpack.c.b16 %v1996, %v1994
    %v2119 = vpack.c.b16 %v1997, %v1995
    %v2120 = vpack.c.b16 %v2000, %v1998
    %v2121 = vpack.c.b16 %v2001, %v1999
    %v2122 = vpack.c.b16 %v2004, %v2002
    %v2123 = vpack.c.b16 %v2005, %v2003
    %v2124 = vpack.c.b16 %v2008, %v2006
    %v2125 = vpack.c.b16 %v2009, %v2007
    %v2126 = vpack.c.b16 %v2012, %v2010
    %v2127 = vpack.c.b16 %v2013, %v2011
    %v2128 = vpack.c.b16 %v2016, %v2014
    %v2129 = vpack.c.b16 %v2017, %v2015
    %v2130 = vpack.c.b16 %v2020, %v2018
    %v2131 = vpack.c.b16 %v2021, %v2019
    %v2132 = vpack.c.b16 %v2024, %v2022
    %v2133 = vpack.c.b16 %v2025, %v2023
    %v2134 = vpack.c.b16 %v2028, %v2026
    %v2135 = vpack.c.b16 %v2029, %v2027
    %v2136 = vpack.c.b16 %v2032, %v2030
    %v2137 = vpack.c.b16 %v2033, %v2031
    %v2138 = vpack.c.b16 %v2036, %v2034
    %v2139 = vpack.c.b16 %v2037, %v2035
    %v2140 = vpack.c.b16 %v2040, %v2038
    %v2141 = vpack.c.b16 %v2041, %v2039
    %v2142 = vpack.c.b16 %v2044, %v2042
    %v2143 = vpack.c.b16 %v2045, %v2043
    %v2144 = vpack.c.b16 %v2048, %v2046
    %v2145 = vpack.c.b16 %v2049, %v2047
    %v2146 = vpack.c.b16 %v2052, %v2050
    %v2147 = vpack.c.b16 %v2053, %v2051
    %v2148 = vpack.c.b16 %v2056, %v2054
    %v2149 = vpack.c.b16 %v2057, %v2055
    %v2150 = vpack.c.b16 %v2060, %v2058
    %v2151 = vpack.c.b16 %v2061, %v2059
    %v2152 = vpack.c.b16 %v2064, %v2062
    %v2153 = vpack.c.b16 %v2065, %v2063
    %v2154 = vpack.c.b16 %v2068, %v2066
    %v2155 = vpack.c.b16 %v2069, %v2067
    %v2156 = vpack.c.b16 %v2072, %v2070
    %v2157 = vpack.c.b16 %v2073, %v2071
    %v2158 = vpack.c.b16 %v2076, %v2074
    %v2159 = vpack.c.b16 %v2077, %v2075
    %v2160 = vpack.c.b16 %v2080, %v2078
    %v2161 = vpack.c.b16 %v2081, %v2079
    %v2162 = vpack.c.b16 %v2084, %v2082
    %v2163 = vpack.c.b16 %v2085, %v2083
    %v2164 = vpack.c.b16 %v2088, %v2086
    %v2165 = vpack.c.b16 %v2089, %v2087
    %v2166 = vpack.c.b16 %v2092, %v2090
    %v2167 = vpack.c.b16 %v2093, %v2091
    %v2168 = vpack.c.b16 %v2096, %v2094
    %v2169 = vpack.c.b16 %v2097, %v2095
    %v2170 = vpack.c.b16 %v2100, %v2098
    %v2171 = vpack.c.b16 %v2101, %v2099
    %v2172 = vpack.c.b16 %v2104, %v2102
    %v2173 = vpack.c.b16 %v2105, %v2103
    %v2174 = vpack.c.b16 %v2108, %v2106
    %v2175 = vpack.c.b16 %v2109, %v2107
    %v2176 = vpack.c.b16 %v2112, %v2110
    %v2177 = vpack.c.b16 %v2113, %v2111
    %2242 = vmatprep.subr.bf16.mxu0 %v2129
    %2243 = vmatpush1.bf16.msra.mxu0 %v2128
    %2244 = vmatprep.subr.bf16.mxu0 %v2127
    %2245 = vmatpush1.bf16.msra.mxu0 %v2126
    %2246 = vmatprep.subr.bf16.mxu0 %v2125
    %2247 = vmatpush1.bf16.msra.mxu0 %v2124
    %2248 = vmatprep.subr.bf16.mxu0 %v2123
    %2249 = vmatpush1.bf16.msra.mxu0 %v2122
    %2250 = vmatprep.subr.bf16.mxu0 %v2121
    %2251 = vmatpush1.bf16.msra.mxu0 %v2120
    %2252 = vmatprep.subr.bf16.mxu0 %v2119
    %2253 = vmatpush1.bf16.msra.mxu0 %v2118
    %2254 = vmatprep.subr.bf16.mxu0 %v2117
    %2255 = vmatpush1.bf16.msra.mxu0 %v2116
    %2256 = vmatprep.subr.bf16.mxu0 %v2115
    %2257 = vmatpush1.bf16.msra.mxu0 %v2114
    %2258 = vmatprep.subr.bf16.mxu0 %v2145
    %2259 = vmatpush2.bf16.msra.mxu0 %v2144
    %2260 = vmatprep.subr.bf16.mxu0 %v2143
    %2261 = vmatpush2.bf16.msra.mxu0 %v2142
    %2262 = vmatprep.subr.bf16.mxu0 %v2141
    %2263 = vmatpush2.bf16.msra.mxu0 %v2140
    %2264 = vmatprep.subr.bf16.mxu0 %v2139
    %2265 = vmatpush2.bf16.msra.mxu0 %v2138
    %2266 = vmatprep.subr.bf16.mxu0 %v2137
    %2267 = vmatpush2.bf16.msra.mxu0 %v2136
    %2268 = vmatprep.subr.bf16.mxu0 %v2135
    %2269 = vmatpush2.bf16.msra.mxu0 %v2134
    %2270 = vmatprep.subr.bf16.mxu0 %v2133
    %2271 = vmatpush2.bf16.msra.mxu0 %v2132
    %2272 = vmatprep.subr.bf16.mxu0 %v2131
    %2273 = vmatpush2.bf16.msra.mxu0 %v2130
    %2274 = vmatprep.mubr.bf16.mxu0 %v1843
    %2275 = vmatmul.mubr.bf16.gmra.mxu0 %v1842
    %v2276 = vpop.f32.mrf.mxu0
    %v2277 = vadd.f32 %v1915, %v2276
    %v2278 = vpop.f32.mrf.mxu0
    %v2279 = vadd.f32 %v1919, %v2278
    %v2280 = vpop.f32.mrf.mxu0
    %v2281 = vadd.f32 %v1915, %v2280
    %v2282 = vpop.f32.mrf.mxu0
    %v2283 = vadd.f32 %v1919, %v2282
    %2284 = vdwg.mxu0
    %2285 = vmatprep.subr.bf16.mxu0 %v2161
    %2286 = vmatpush1.bf16.msra.mxu0 %v2160
    %2287 = vmatprep.subr.bf16.mxu0 %v2159
    %2288 = vmatpush1.bf16.msra.mxu0 %v2158
    %2289 = vmatprep.subr.bf16.mxu0 %v2157
    %2290 = vmatpush1.bf16.msra.mxu0 %v2156
    %2291 = vmatprep.subr.bf16.mxu0 %v2155
    %2292 = vmatpush1.bf16.msra.mxu0 %v2154
    %2293 = vmatprep.subr.bf16.mxu0 %v2153
    %2294 = vmatpush1.bf16.msra.mxu0 %v2152
    %2295 = vmatprep.subr.bf16.mxu0 %v2151
    %2296 = vmatpush1.bf16.msra.mxu0 %v2150
    %2297 = vmatprep.subr.bf16.mxu0 %v2149
    %2298 = vmatpush1.bf16.msra.mxu0 %v2148
    %2299 = vmatprep.subr.bf16.mxu0 %v2147
    %2300 = vmatpush1.bf16.msra.mxu0 %v2146
    %2301 = vmatprep.subr.bf16.mxu0 %v2177
    %2302 = vmatpush2.bf16.msra.mxu0 %v2176
    %2303 = vmatprep.subr.bf16.mxu0 %v2175
    %2304 = vmatpush2.bf16.msra.mxu0 %v2174
    %2305 = vmatprep.subr.bf16.mxu0 %v2173
    %2306 = vmatpush2.bf16.msra.mxu0 %v2172
    %2307 = vmatprep.subr.bf16.mxu0 %v2171
    %2308 = vmatpush2.bf16.msra.mxu0 %v2170
    %2309 = vmatprep.subr.bf16.mxu0 %v2169
    %2310 = vmatpush2.bf16.msra.mxu0 %v2168
    %2311 = vmatprep.subr.bf16.mxu0 %v2167
    %2312 = vmatpush2.bf16.msra.mxu0 %v2166
    %2313 = vmatprep.subr.bf16.mxu0 %v2165
    %2314 = vmatpush2.bf16.msra.mxu0 %v2164
    %2315 = vmatprep.subr.bf16.mxu0 %v2163
    %2316 = vmatpush2.bf16.msra.mxu0 %v2162
    %2317 = vmatprep.mubr.bf16.mxu0 %v1845
    %2318 = vmatmul.mubr.bf16.gmra.mxu0 %v1844
    %v2319 = vpop.f32.mrf.mxu0
    %v2320 = vadd.f32 %v2277, %v2319
    %v2321 = vpop.f32.mrf.mxu0
    %v2322 = vadd.f32 %v2279, %v2321
    %v2323 = vpop.f32.mrf.mxu0
    %v2324 = vadd.f32 %v2281, %v2323
    %v2325 = vpop.f32.mrf.mxu0
    %v2326 = vadd.f32 %v2283, %v2325
    %2327 = vdwg.mxu0
    %v2328 = vmax.f32 %v2320, 0.0
    %v2329 = vmax.f32 %v2322, 0.0
    %v2330 = vmax.f32 %v2324, 0.0
    %v2331 = vmax.f32 %v2326, 0.0
    %v2332 = vpack.c.bf16 %v2330, %v2328
    %v2333 = vpack.c.bf16 %v2331, %v2329
    %v2334 = vld [vmem:[#allocation4] sm:$0xf]
    %v2335 = vld [vmem:[#allocation4 + $0x4] sm:$0xf]
    %v2336 = vld [vmem:[#allocation4 + $0x8] sm:$0xf]
    %v2337 = vld [vmem:[#allocation4 + $0xc] sm:$0xf]
    %v2338 = vld [vmem:[#allocation4 + $0x10] sm:$0xf]
    %v2339 = vld [vmem:[#allocation4 + $0x14] sm:$0xf]
    %v2340 = vld [vmem:[#allocation4 + $0x18] sm:$0xf]
    %v2341 = vld [vmem:[#allocation4 + $0x1c] sm:$0xf]
    %v2342 = vld [vmem:[#allocation4 + $0x20] sm:$0xf]
    %v2343 = vld [vmem:[#allocation4 + $0x24] sm:$0xf]
    %v2344 = vld [vmem:[#allocation4 + $0x28] sm:$0xf]
    %v2345 = vld [vmem:[#allocation4 + $0x2c] sm:$0xf]
    %v2346 = vld [vmem:[#allocation4 + $0x30] sm:$0xf]
    %v2347 = vld [vmem:[#allocation4 + $0x34] sm:$0xf]
    %v2348 = vld [vmem:[#allocation4 + $0x38] sm:$0xf]
    %v2349 = vld [vmem:[#allocation4 + $0x3c] sm:$0xf]
    %v2350 = vld [vmem:[#allocation4 + $0x40] sm:$0xf]
    %v2351 = vld [vmem:[#allocation4 + $0x44] sm:$0xf]
    %v2352 = vld [vmem:[#allocation4 + $0x48] sm:$0xf]
    %v2353 = vld [vmem:[#allocation4 + $0x4c] sm:$0xf]
    %v2354 = vld [vmem:[#allocation4 + $0x50] sm:$0xf]
    %v2355 = vld [vmem:[#allocation4 + $0x54] sm:$0xf]
    %v2356 = vld [vmem:[#allocation4 + $0x58] sm:$0xf]
    %v2357 = vld [vmem:[#allocation4 + $0x5c] sm:$0xf]
    %v2358 = vld [vmem:[#allocation4 + $0x60] sm:$0xf]
    %v2359 = vld [vmem:[#allocation4 + $0x64] sm:$0xf]
    %v2360 = vld [vmem:[#allocation4 + $0x68] sm:$0xf]
    %v2361 = vld [vmem:[#allocation4 + $0x6c] sm:$0xf]
    %v2362 = vld [vmem:[#allocation4 + $0x70] sm:$0xf]
    %v2363 = vld [vmem:[#allocation4 + $0x74] sm:$0xf]
    %v2364 = vld [vmem:[#allocation4 + $0x78] sm:$0xf]
    %v2365 = vld [vmem:[#allocation4 + $0x7c] sm:$0xf]
    %v2366 = vld [vmem:[%s6] sm:$0x1]
    %v2368 = vlaneseq
    %v2369 = vshrl.u32 %v2368, 7
    %v2370 = vsub.s32 0, %v2369
    %v2371 = vrot.slane %v2366, %v2370
    %v2405 = vunpack.c.l.b16 %v2334
    %v2406 = vunpack.c.l.b16 %v2335
    %v2407 = vunpack.c.l.b16 %v2336
    %v2408 = vunpack.c.l.b16 %v2337
    %v2409 = vunpack.c.l.b16 %v2338
    %v2410 = vunpack.c.l.b16 %v2339
    %v2411 = vunpack.c.l.b16 %v2340
    %v2412 = vunpack.c.l.b16 %v2341
    %v2413 = vunpack.c.l.b16 %v2342
    %v2414 = vunpack.c.l.b16 %v2343
    %v2415 = vunpack.c.l.b16 %v2344
    %v2416 = vunpack.c.l.b16 %v2345
    %v2417 = vunpack.c.l.b16 %v2346
    %v2418 = vunpack.c.l.b16 %v2347
    %v2419 = vunpack.c.l.b16 %v2348
    %v2420 = vunpack.c.l.b16 %v2349
    %v2421 = vunpack.c.l.b16 %v2350
    %v2422 = vunpack.c.l.b16 %v2351
    %v2423 = vunpack.c.l.b16 %v2352
    %v2424 = vunpack.c.l.b16 %v2353
    %v2425 = vunpack.c.l.b16 %v2354
    %v2426 = vunpack.c.l.b16 %v2355
    %v2427 = vunpack.c.l.b16 %v2356
    %v2428 = vunpack.c.l.b16 %v2357
    %v2429 = vunpack.c.l.b16 %v2358
    %v2430 = vunpack.c.l.b16 %v2359
    %v2431 = vunpack.c.l.b16 %v2360
    %v2432 = vunpack.c.l.b16 %v2361
    %v2433 = vunpack.c.l.b16 %v2362
    %v2434 = vunpack.c.l.b16 %v2363
    %v2435 = vunpack.c.l.b16 %v2364
    %v2436 = vunpack.c.l.b16 %v2365
    %v2437 = vpack.c.b16 %v2406, %v2405
    %v2438 = vpack.c.b16 %v2408, %v2407
    %v2439 = vpack.c.b16 %v2410, %v2409
    %v2440 = vpack.c.b16 %v2412, %v2411
    %v2441 = vpack.c.b16 %v2414, %v2413
    %v2442 = vpack.c.b16 %v2416, %v2415
    %v2443 = vpack.c.b16 %v2418, %v2417
    %v2444 = vpack.c.b16 %v2420, %v2419
    %v2445 = vpack.c.b16 %v2422, %v2421
    %v2446 = vpack.c.b16 %v2424, %v2423
    %v2447 = vpack.c.b16 %v2426, %v2425
    %v2448 = vpack.c.b16 %v2428, %v2427
    %v2449 = vpack.c.b16 %v2430, %v2429
    %v2450 = vpack.c.b16 %v2432, %v2431
    %v2451 = vpack.c.b16 %v2434, %v2433
    %v2452 = vpack.c.b16 %v2436, %v2435
    %2469 = vmatprep.subr.bf16.mxu0 0
    %2470 = vmatpush1.bf16.msra.mxu0 %v2444
    %2471 = vmatprep.subr.bf16.mxu0 0
    %2472 = vmatpush1.bf16.msra.mxu0 %v2443
    %2473 = vmatprep.subr.bf16.mxu0 0
    %2474 = vmatpush1.bf16.msra.mxu0 %v2442
    %2475 = vmatprep.subr.bf16.mxu0 0
    %2476 = vmatpush1.bf16.msra.mxu0 %v2441
    %2477 = vmatprep.subr.bf16.mxu0 0
    %2478 = vmatpush1.bf16.msra.mxu0 %v2440
    %2479 = vmatprep.subr.bf16.mxu0 0
    %2480 = vmatpush1.bf16.msra.mxu0 %v2439
    %2481 = vmatprep.subr.bf16.mxu0 0
    %2482 = vmatpush1.bf16.msra.mxu0 %v2438
    %2483 = vmatprep.subr.bf16.mxu0 0
    %2484 = vmatpush1.bf16.msra.mxu0 %v2437
    %2485 = vmatprep.subr.bf16.mxu0 0
    %2486 = vmatpush2.bf16.msra.mxu0 %v2452
    %2487 = vmatprep.subr.bf16.mxu0 0
    %2488 = vmatpush2.bf16.msra.mxu0 %v2451
    %2489 = vmatprep.subr.bf16.mxu0 0
    %2490 = vmatpush2.bf16.msra.mxu0 %v2450
    %2491 = vmatprep.subr.bf16.mxu0 0
    %2492 = vmatpush2.bf16.msra.mxu0 %v2449
    %2493 = vmatprep.subr.bf16.mxu0 0
    %2494 = vmatpush2.bf16.msra.mxu0 %v2448
    %2495 = vmatprep.subr.bf16.mxu0 0
    %2496 = vmatpush2.bf16.msra.mxu0 %v2447
    %2497 = vmatprep.subr.bf16.mxu0 0
    %2498 = vmatpush2.bf16.msra.mxu0 %v2446
    %2499 = vmatprep.subr.bf16.mxu0 0
    %2500 = vmatpush2.bf16.msra.mxu0 %v2445
    %2501 = vmatprep.mubr.bf16.mxu0 %v2333
    %2502 = vmatmul.mubr.bf16.gmra.mxu0 %v2332
    %v2503 = vpop.f32.mrf.mxu0
    %v2504 = vadd.f32 %v2371, %v2503
    %v2505 = vpop.f32.mrf.mxu0
    %v2506 = vpop.f32.mrf.mxu0
    %v2507 = vadd.f32 %v2371, %v2506
    %v2508 = vpop.f32.mrf.mxu0
    %2509 = vdwg.mxu0
    %v2510 = vmax.f32 %v2504, 0.0
    %v2511 = vmax.f32 %v2507, 0.0
    %v2512 = vpack.c.bf16 %v2511, %v2510
    %v2513 = vld [vmem:[%s7] sm:$0xf]
    %v2514 = vld [vmem:[%s7 + $0x4] sm:$0xf]
    %v2515 = vld [vmem:[%s7 + $0x8] sm:$0xf]
    %v2516 = vld [vmem:[%s7 + $0xc] sm:$0xf]
    %v2517 = vld [vmem:[%s7 + $0x10] sm:$0xf]
    %v2518 = vld [vmem:[%s7 + $0x14] sm:$0xf]
    %v2519 = vld [vmem:[%s7 + $0x18] sm:$0xf]
    %v2520 = vld [vmem:[%s7 + $0x1c] sm:$0xf]
    %v2521 = vld [vmem:[%s7 + $0x20] sm:$0xf]
    %v2522 = vld [vmem:[%s7 + $0x24] sm:$0xf]
    %v2523 = vld [vmem:[%s7 + $0x28] sm:$0xf]
    %v2524 = vld [vmem:[%s7 + $0x2c] sm:$0xf]
    %v2525 = vld [vmem:[%s7 + $0x30] sm:$0xf]
    %v2526 = vld [vmem:[%s7 + $0x34] sm:$0xf]
    %v2527 = vld [vmem:[%s7 + $0x38] sm:$0xf]
    %v2528 = vld [vmem:[%s7 + $0x3c] sm:$0xf]
    %v2529 = vld [vmem:[%s8] sm:$0x1]
    %v2531 = vlaneseq
    %v2532 = vshrl.u32 %v2531, 7
    %v2533 = vsub.s32 0, %v2532
    %v2534 = vrot.slane %v2529, %v2533
    %v2552 = vunpack.c.l.b16 %v2513
    %v2553 = vunpack.c.l.b16 %v2514
    %v2554 = vunpack.c.l.b16 %v2515
    %v2555 = vunpack.c.l.b16 %v2516
    %v2556 = vunpack.c.l.b16 %v2517
    %v2557 = vunpack.c.l.b16 %v2518
    %v2558 = vunpack.c.l.b16 %v2519
    %v2559 = vunpack.c.l.b16 %v2520
    %v2560 = vunpack.c.l.b16 %v2521
    %v2561 = vunpack.c.l.b16 %v2522
    %v2562 = vunpack.c.l.b16 %v2523
    %v2563 = vunpack.c.l.b16 %v2524
    %v2564 = vunpack.c.l.b16 %v2525
    %v2565 = vunpack.c.l.b16 %v2526
    %v2566 = vunpack.c.l.b16 %v2527
    %v2567 = vunpack.c.l.b16 %v2528
    %v2568 = vpack.c.b16 %v2553, %v2552
    %v2569 = vpack.c.b16 %v2555, %v2554
    %v2570 = vpack.c.b16 %v2557, %v2556
    %v2571 = vpack.c.b16 %v2559, %v2558
    %v2572 = vpack.c.b16 %v2561, %v2560
    %v2573 = vpack.c.b16 %v2563, %v2562
    %v2574 = vpack.c.b16 %v2565, %v2564
    %v2575 = vpack.c.b16 %v2567, %v2566
    %2584 = vmatprep.subr.bf16.mxu0 0
    %2585 = vmatpush1.bf16.msra.mxu0 %v2575
    %2586 = vmatprep.subr.bf16.mxu0 0
    %2587 = vmatpush1.bf16.msra.mxu0 %v2574
    %2588 = vmatprep.subr.bf16.mxu0 0
    %2589 = vmatpush1.bf16.msra.mxu0 %v2573
    %2590 = vmatprep.subr.bf16.mxu0 0
    %2591 = vmatpush1.bf16.msra.mxu0 %v2572
    %2592 = vmatprep.subr.bf16.mxu0 0
    %2593 = vmatpush1.bf16.msra.mxu0 %v2571
    %2594 = vmatprep.subr.bf16.mxu0 0
    %2595 = vmatpush1.bf16.msra.mxu0 %v2570
    %2596 = vmatprep.subr.bf16.mxu0 0
    %2597 = vmatpush1.bf16.msra.mxu0 %v2569
    %2598 = vmatprep.subr.bf16.mxu0 0
    %2599 = vmatpush1.bf16.msra.mxu0 %v2568
    %2600 = vmatprep.subr.bf16.mxu0 0
    %2601 = vmatpush2.bf16.msra.mxu0 0
    %2602 = vmatprep.subr.bf16.mxu0 0
    %2603 = vmatpush2.bf16.msra.mxu0 0
    %2604 = vmatprep.subr.bf16.mxu0 0
    %2605 = vmatpush2.bf16.msra.mxu0 0
    %2606 = vmatprep.subr.bf16.mxu0 0
    %2607 = vmatpush2.bf16.msra.mxu0 0
    %2608 = vmatprep.subr.bf16.mxu0 0
    %2609 = vmatpush2.bf16.msra.mxu0 0
    %2610 = vmatprep.subr.bf16.mxu0 0
    %2611 = vmatpush2.bf16.msra.mxu0 0
    %2612 = vmatprep.subr.bf16.mxu0 0
    %2613 = vmatpush2.bf16.msra.mxu0 0
    %2614 = vmatprep.subr.bf16.mxu0 0
    %2615 = vmatpush2.bf16.msra.mxu0 0
    %2616 = vmatprep.mubr.bf16.mxu0 0
    %2617 = vmatmul.mubr.bf16.gmra.mxu0 %v2512
    %v2618 = vpop.f32.mrf.mxu0
    %v2619 = vadd.f32 %v2534, %v2618
    %v2620 = vpop.f32.mrf.mxu0
    %v2621 = vpop.f32.mrf.mxu0
    %v2622 = vadd.f32 %v2534, %v2621
    %v2623 = vpop.f32.mrf.mxu0
    %2624 = vdwg.mxu0
    %v2625 = vmax.f32 %v2619, 0.0
    %v2626 = vmax.f32 %v2622, 0.0
    %v2627 = vpack.c.bf16 %v2626, %v2625
    %v2628 = vld [vmem:[#allocation6] sm:$0xf]
    %v2629 = vld [vmem:[#allocation6 + $0x4] sm:$0xf]
    %v2630 = vld [vmem:[#allocation6 + $0x8] sm:$0xf]
    %v2631 = vld [vmem:[#allocation6 + $0xc] sm:$0xf]
    %v2632 = vld [vmem:[#allocation6 + $0x10] sm:$0xf]
    %v2633 = vld [vmem:[#allocation6 + $0x14] sm:$0xf]
    %v2634 = vld [vmem:[#allocation6 + $0x18] sm:$0xf]
    %v2635 = vld [vmem:[#allocation6 + $0x1c] sm:$0xf]
    %v2636 = vld [vmem:[#allocation6 + $0x20] sm:$0xf]
    %v2637 = vld [vmem:[#allocation6 + $0x24] sm:$0xf]
    %v2638 = vld [vmem:[#allocation6 + $0x28] sm:$0xf]
    %v2639 = vld [vmem:[#allocation6 + $0x2c] sm:$0xf]
    %v2640 = vld [vmem:[#allocation6 + $0x30] sm:$0xf]
    %v2641 = vld [vmem:[#allocation6 + $0x34] sm:$0xf]
    %v2642 = vld [vmem:[#allocation6 + $0x38] sm:$0xf]
    %v2643 = vld [vmem:[#allocation6 + $0x3c] sm:$0xf]
    %v2644 = vld [vmem:[%s10] sm:$0x1]
    %v2646 = vlaneseq
    %v2647 = vshrl.u32 %v2646, 7
    %v2648 = vsub.s32 0, %v2647
    %v2649 = vrot.slane %v2644, %v2648
    %v2667 = vunpack.c.l.b16 %v2628
    %v2668 = vunpack.c.l.b16 %v2629
    %v2669 = vunpack.c.l.b16 %v2630
    %v2670 = vunpack.c.l.b16 %v2631
    %v2671 = vunpack.c.l.b16 %v2632
    %v2672 = vunpack.c.l.b16 %v2633
    %v2673 = vunpack.c.l.b16 %v2634
    %v2674 = vunpack.c.l.b16 %v2635
    %v2675 = vunpack.c.l.b16 %v2636
    %v2676 = vunpack.c.l.b16 %v2637
    %v2677 = vunpack.c.l.b16 %v2638
    %v2678 = vunpack.c.l.b16 %v2639
    %v2679 = vunpack.c.l.b16 %v2640
    %v2680 = vunpack.c.l.b16 %v2641
    %v2681 = vunpack.c.l.b16 %v2642
    %v2682 = vunpack.c.l.b16 %v2643
    %v2683 = vpack.c.b16 %v2668, %v2667
    %v2684 = vpack.c.b16 %v2670, %v2669
    %v2685 = vpack.c.b16 %v2672, %v2671
    %v2686 = vpack.c.b16 %v2674, %v2673
    %v2687 = vpack.c.b16 %v2676, %v2675
    %v2688 = vpack.c.b16 %v2678, %v2677
    %v2689 = vpack.c.b16 %v2680, %v2679
    %v2690 = vpack.c.b16 %v2682, %v2681
    %2699 = vmatprep.subr.bf16.mxu0 0
    %2700 = vmatpush1.bf16.msra.mxu0 %v2690
    %2701 = vmatprep.subr.bf16.mxu0 0
    %2702 = vmatpush1.bf16.msra.mxu0 %v2689
    %2703 = vmatprep.subr.bf16.mxu0 0
    %2704 = vmatpush1.bf16.msra.mxu0 %v2688
    %2705 = vmatprep.subr.bf16.mxu0 0
    %2706 = vmatpush1.bf16.msra.mxu0 %v2687
    %2707 = vmatprep.subr.bf16.mxu0 0
    %2708 = vmatpush1.bf16.msra.mxu0 %v2686
    %2709 = vmatprep.subr.bf16.mxu0 0
    %2710 = vmatpush1.bf16.msra.mxu0 %v2685
    %2711 = vmatprep.subr.bf16.mxu0 0
    %2712 = vmatpush1.bf16.msra.mxu0 %v2684
    %2713 = vmatprep.subr.bf16.mxu0 0
    %2714 = vmatpush1.bf16.msra.mxu0 %v2683
    %2715 = vmatprep.subr.bf16.mxu0 0
    %2716 = vmatpush2.bf16.msra.mxu0 0
    %2717 = vmatprep.subr.bf16.mxu0 0
    %2718 = vmatpush2.bf16.msra.mxu0 0
    %2719 = vmatprep.subr.bf16.mxu0 0
    %2720 = vmatpush2.bf16.msra.mxu0 0
    %2721 = vmatprep.subr.bf16.mxu0 0
    %2722 = vmatpush2.bf16.msra.mxu0 0
    %2723 = vmatprep.subr.bf16.mxu0 0
    %2724 = vmatpush2.bf16.msra.mxu0 0
    %2725 = vmatprep.subr.bf16.mxu0 0
    %2726 = vmatpush2.bf16.msra.mxu0 0
    %2727 = vmatprep.subr.bf16.mxu0 0
    %2728 = vmatpush2.bf16.msra.mxu0 0
    %2729 = vmatprep.subr.bf16.mxu0 0
    %2730 = vmatpush2.bf16.msra.mxu0 0
    %2731 = vmatprep.mubr.bf16.mxu0 0
    %2732 = vmatmul.mubr.bf16.gmra.mxu0 %v2627
    %v2733 = vpop.f32.mrf.mxu0
    %v2734 = vadd.f32 %v2649, %v2733
    %v2735 = vpop.f32.mrf.mxu0
    %v2736 = vpop.f32.mrf.mxu0
    %v2737 = vadd.f32 %v2649, %v2736
    %v2738 = vpop.f32.mrf.mxu0
    %2739 = vdwg.mxu0
    %v2740 = vlaneseq
    %v2741 = vand.u32 %v2740, 127
    %vm2742 = vcmp.lt.s32.totalorder %v2741, 10
    %v2743 = vsel %vm2742, %v2734, -1e+30
    %v2744 = vsel %vm2742, %v2737, -1e+30
    %2745 = vmax.xlane.f32.xlu0 %v2743
    %v2746 = vpop.xlane.xlu0 %2745
    %2747 = vmax.xlane.f32.xlu0 %v2744
    %v2748 = vpop.xlane.xlu0 %2747
    %v2749 = vsub.f32 %v2743, %v2746
    %v2750 = vsub.f32 %v2744, %v2748
    %v2751 = vmul.f32 %v2749, 1.442695
    %v2752 = vpow.pop %v2751
    %v2753 = vmul.f32 %v2750, 1.442695
    %v2754 = vpow.pop %v2753
    %2755 = vadd.xlane.f32.xlu0 %v2752
    %v2756 = vpop.xlane.xlu0 %2755
    %2757 = vadd.xlane.f32.xlu0 %v2754
    %v2758 = vpop.xlane.xlu0 %2757
    %v2759 = vlog2.pop %v2756
    %v2760 = vmul.f32 %v2759, 0.6931472
    %v2761 = vlog2.pop %v2758
    %v2762 = vmul.f32 %v2761, 0.6931472
    %v2763 = vsub.f32 %v2749, %v2760
    %v2764 = vsub.f32 %v2750, %v2762
    %2765 = vst [vmem:[%s11] sm:$0xff] %v2763
    %2766 = vst [vmem:[%s11 + $0x8] sm:$0xff] %v2764
    // Predicated region
    $region58: #{classifier2_forward.1} parent=1 // pred_check
      _
    $region59: #{classifier2_forward.1} parent=1 // pred_check_branch
      %2768 = sbr.rel (0) target = $region61
    $region60: #{classifier2_forward.1} parent=1 // pred_region
      _
    $region61: #{classifier2_forward.1} parent=1 // pred_fallthru
      _
    // Predicated region
    $region62: #{classifier2_forward.1} parent=1 // pred_check
      _
    $region63: #{classifier2_forward.1} parent=1 // pred_check_branch
      %2770 = sbr.rel (0) target = $region65
    $region64: #{classifier2_forward.1} parent=1 // pred_region
      _
    $region65: #{classifier2_forward.1} parent=1 // pred_fallthru
      _
    %2771 = vsyncpa [#allocation3], 1
    %2772 = vsyncpa [#allocation5], 1

</llo_original>
